<compile_context>
chip_gen: v6e
topology: v6e:2x2x1
jax: 0.10.0
libtpu: 0.0.40
codegen_flags: <defaults>
</compile_context>

<pallas_src>
import functools
import random

import jax
import jax.numpy as jnp
from jax.experimental import pallas as pl
from jax.experimental.pallas import tpu as pltpu

_VMEM = pl.BlockSpec(memory_space=pltpu.MemorySpace.VMEM)
_SMEM = pl.BlockSpec(memory_space=pltpu.MemorySpace.SMEM)


# ----------------------------- encoder kernel ------------------------------ #

def _encoder_kernel(emb_ref, wih_f_ref, bih_f_ref, whh_f_ref, bhh_f_ref,
                    wih_b_ref, bih_b_ref, whh_b_ref, bhh_b_ref,
                    fcw_f_ref, fcw_b_ref, fc_b_ref,
                    enc_ref, hid_ref,
                    gif_ref, gib_ref, hf_ref, *, H):
    S, B, E = emb_ref.shape

    # Hoisted input-to-hidden matmuls for ALL timesteps, both directions.
    emb_flat = emb_ref[...].reshape(S * B, E)
    gif_ref[...] = (
        jnp.dot(emb_flat, wih_f_ref[...], preferred_element_type=jnp.float32)
        + bih_f_ref[...]).reshape(S, B, 3 * H)
    gib_ref[...] = (
        jnp.dot(emb_flat, wih_b_ref[...], preferred_element_type=jnp.float32)
        + bih_b_ref[...]).reshape(S, B, 3 * H)

    def gru(gi, h, whh, bhh):
        # PyTorch GRUCell gate order (r, z, n); slices are 128-lane aligned.
        gh = jnp.dot(h, whh, preferred_element_type=jnp.float32) + bhh
        r = jax.nn.sigmoid(gi[:, :H] + gh[:, :H])
        z = jax.nn.sigmoid(gi[:, H:2 * H] + gh[:, H:2 * H])
        n = jnp.tanh(gi[:, 2 * H:] + r * gh[:, 2 * H:])
        return (1.0 - z) * n + z * h

    def fwd(t, h):
        h = gru(gif_ref[t], h, whh_f_ref[...], bhh_f_ref[...])
        hf_ref[t] = h
        return h

    h_f = jax.lax.fori_loop(0, S, fwd, jnp.zeros((B, H), jnp.float32))

    def bwd(i, h):
        t = S - 1 - i
        h = gru(gib_ref[t], h, whh_b_ref[...], bhh_b_ref[...])
        enc_ref[t] = jnp.concatenate([hf_ref[t], h], axis=-1)
        return h

    h_b = jax.lax.fori_loop(0, S, bwd, jnp.zeros((B, H), jnp.float32))

    # hidden0 = tanh([h_f ; h_b] @ fc_w + fc_b)  (concat avoided via split W)
    hid_ref[...] = jnp.tanh(
        jnp.dot(h_f, fcw_f_ref[...], preferred_element_type=jnp.float32)
        + jnp.dot(h_b, fcw_b_ref[...], preferred_element_type=jnp.float32)
        + fc_b_ref[...])


def encoder_forward(p, src):
    S, B = src.shape
    H = p["enc_whh_f"].shape[0]
    D = p["fc_w"].shape[1]
    emb = jnp.take(p["enc_emb"], src, axis=0)                  # (S, B, E) gather in XLA

    enc, hid0 = pl.pallas_call(
        functools.partial(_encoder_kernel, H=H),
        out_shape=(jax.ShapeDtypeStruct((S, B, 2 * H), jnp.float32),
                   jax.ShapeDtypeStruct((B, D), jnp.float32)),
        in_specs=[_VMEM] * 12,
        out_specs=(_VMEM, _VMEM),
        scratch_shapes=[pltpu.VMEM((S, B, 3 * H), jnp.float32),
                        pltpu.VMEM((S, B, 3 * H), jnp.float32),
                        pltpu.VMEM((S, B, H), jnp.float32)],
    )(emb,
      p["enc_wih_f"], p["enc_bih_f"].reshape(1, -1),
      p["enc_whh_f"], p["enc_bhh_f"].reshape(1, -1),
      p["enc_wih_b"], p["enc_bih_b"].reshape(1, -1),
      p["enc_whh_b"], p["enc_bhh_b"].reshape(1, -1),
      p["fc_w"][:H], p["fc_w"][H:], p["fc_b"].reshape(1, -1))
    return enc, hid0


# ----------------------------- decoder kernel ------------------------------ #

def _decoder_kernel(enc_ref, hid_ref, tgt_oh_ref, tf_ref, emb_tab_ref,
                    wa_h_ref, wa_e_ref, attn_b_ref, v_ref,
                    wih_e_ref, wih_c_ref, bih_ref, whh_ref, bhh_ref,
                    ow_h_ref, ow_c_ref, ow_e_ref, ob_ref,
                    outputs_ref, encproj_ref, *, D, T):
    B, S, E2 = enc_ref.shape
    V = outputs_ref.shape[-1]

    # Attention encoder-side projection (+bias): invariant across steps.
    encproj_ref[...] = (
        jnp.dot(enc_ref[...].reshape(B * S, E2), wa_e_ref[...],
                preferred_element_type=jnp.float32)
        + attn_b_ref[...]).reshape(B, S, D)

    # outputs[0] stays zero, as in the reference (zero-initialized buffer).
    outputs_ref[0] = jnp.zeros((B, V), jnp.float32)

    # Initial decoder input = tgt[0] (embedding via one-hot matmul).
    emb0 = jnp.dot(tgt_oh_ref[0], emb_tab_ref[...],
                   preferred_element_type=jnp.float32)          # (B, E)
    col_ids = jax.lax.broadcasted_iota(jnp.int32, (B, V), 1)

    def step(t, carry):
        h, emb = carry

        # ---- additive attention (hidden-side projection only, per step) ----
        hproj = jnp.dot(h, wa_h_ref[...], preferred_element_type=jnp.float32)  # (B, D)
        energy = jnp.tanh(hproj[:, None, :] + encproj_ref[...])                # (B, S, D)
        scores = jnp.sum(energy * v_ref[...][None], axis=-1)                   # (B, S)
        scores = scores - jnp.max(scores, axis=-1, keepdims=True)
        e = jnp.exp(scores)
        a = e * pl.reciprocal(jnp.sum(e, axis=-1, keepdims=True), approx=True)
        ctx = jnp.sum(a[:, :, None] * enc_ref[...], axis=1)                    # (B, 2H)

        # ---- GRU cell (rnn_in = [emb ; ctx], split weights, no concat) ----
        gi = (jnp.dot(emb, wih_e_ref[...], preferred_element_type=jnp.float32)
              + jnp.dot(ctx, wih_c_ref[...], preferred_element_type=jnp.float32)
              + bih_ref[...])
        gh = jnp.dot(h, whh_ref[...], preferred_element_type=jnp.float32) + bhh_ref[...]
        r = jax.nn.sigmoid(gi[:, :D] + gh[:, :D])
        z = jax.nn.sigmoid(gi[:, D:2 * D] + gh[:, D:2 * D])
        n = jnp.tanh(gi[:, 2 * D:] + r * gh[:, 2 * D:])
        h_new = (1.0 - z) * n + z * h

        # ---- output projection fc_out([h_new ; ctx ; emb]) ----
        pred = (jnp.dot(h_new, ow_h_ref[...], preferred_element_type=jnp.float32)
                + jnp.dot(ctx, ow_c_ref[...], preferred_element_type=jnp.float32)
                + jnp.dot(emb, ow_e_ref[...], preferred_element_type=jnp.float32)
                + ob_ref[...])                                                  # (B, V)
        outputs_ref[t] = pred

        # ---- next input: teacher forcing vs argmax(pred) feedback ----
        max_val = jnp.max(pred, axis=-1, keepdims=True)
        top1 = jnp.min(jnp.where(pred >= max_val, col_ids, V),
                       axis=-1, keepdims=True)                                  # (B, 1)
        oh_top1 = (col_ids == top1).astype(jnp.float32)                         # (B, V)
        m = (tf_ref[t] > 0).astype(jnp.float32)
        oh_next = m * tgt_oh_ref[t] + (1.0 - m) * oh_top1
        emb_next = jnp.dot(oh_next, emb_tab_ref[...],
                           preferred_element_type=jnp.float32)                  # (B, E)
        return h_new, emb_next

    jax.lax.fori_loop(1, T, step, (hid_ref[...], emb0))


def decoder_forward(p, tgt, hid0, enc, tf_vec):
    T, B = tgt.shape
    S = enc.shape[0]
    H2 = enc.shape[2]                       # 2 * enc_hid
    D = hid0.shape[1]
    E = p["dec_emb"].shape[1]
    V = p["out_w"].shape[1]

    enc_b = jnp.transpose(enc, (1, 0, 2))                       # (B, S, 2H)
    tgt_oh = jax.nn.one_hot(tgt, V, dtype=jnp.float32)          # (T, B, V)

    return pl.pallas_call(
        functools.partial(_decoder_kernel, D=D, T=T),
        out_shape=jax.ShapeDtypeStruct((T, B, V), jnp.float32),
        in_specs=[_VMEM, _VMEM, _VMEM, _SMEM] + [_VMEM] * 14,
        out_specs=_VMEM,
        scratch_shapes=[pltpu.VMEM((B, S, D), jnp.float32)],
    )(enc_b, hid0, tgt_oh, tf_vec, p["dec_emb"],
      p["attn_w"][:D], p["attn_w"][D:], p["attn_b"].reshape(1, -1),
      p["attn_v"].reshape(1, -1),
      p["dec_wih"][:E], p["dec_wih"][E:], p["dec_bih"].reshape(1, -1),
      p["dec_whh"], p["dec_bhh"].reshape(1, -1),
      p["out_w"][:D], p["out_w"][D:D + H2], p["out_w"][D + H2:],
      p["out_b"].reshape(1, -1))


# ----------------------------- model (glue) -------------------------------- #

def init_params(key, src_vocab, tgt_vocab, emb_dim, enc_hid, dec_hid):
    ks = jax.random.split(key, 20)
    s = 0.1

    def n(k, shape):
        return s * jax.random.normal(k, shape, dtype=jnp.float32)

    H, E, D = enc_hid, emb_dim, dec_hid
    return {
        "enc_emb": n(ks[0], (src_vocab, E)),
        "dec_emb": n(ks[1], (tgt_vocab, E)),
        # encoder bidirectional GRU (stored transposed: (in, 3H))
        "enc_wih_f": n(ks[2], (E, 3 * H)), "enc_whh_f": n(ks[3], (H, 3 * H)),
        "enc_bih_f": n(ks[4], (3 * H,)),   "enc_bhh_f": n(ks[5], (3 * H,)),
        "enc_wih_b": n(ks[6], (E, 3 * H)), "enc_whh_b": n(ks[7], (H, 3 * H)),
        "enc_bih_b": n(ks[8], (3 * H,)),   "enc_bhh_b": n(ks[9], (3 * H,)),
        # fc: (2H -> D) with tanh, produces initial decoder hidden
        "fc_w": n(ks[10], (2 * H, D)), "fc_b": n(ks[11], (D,)),
        # attention: Wa: (D + 2H -> D), v: (D -> 1)
        "attn_w": n(ks[12], (D + 2 * H, D)), "attn_b": n(ks[13], (D,)),
        "attn_v": n(ks[14], (D, 1)),
        # decoder GRU: input = [emb ; context] = E + 2H
        "dec_wih": n(ks[15], (E + 2 * H, 3 * D)), "dec_whh": n(ks[16], (D, 3 * D)),
        "dec_bih": n(ks[17], (3 * D,)),           "dec_bhh": n(ks[18], (3 * D,)),
        # fc_out: [dec_out ; context ; emb] = D + 2H + E -> tgt_vocab
        "out_w": n(ks[19], (D + 2 * H + E, tgt_vocab)),
        "out_b": jnp.zeros((tgt_vocab,), jnp.float32),
    }


def seq2seq_forward(p, src, src_len, tgt, tgt_len,
                    teacher_forcing_ratio=0.5, seed=0):
    del src_len, tgt_len  # TODO(synk): src_len masking not modeled
    T = tgt.shape[0]

    # Host-precomputed teacher-forcing decisions (mirrors `random.random() <
    # ratio` per step); passed as data -> one compiled graph for all seeds.
    random.seed(seed)
    tf_list = [0]                                   # slot 0 unused
    for _ in range(1, T):
        tf_list.append(1 if random.random() < teacher_forcing_ratio else 0)
    tf_vec = jnp.array(tf_list, dtype=jnp.int32)

    enc, hid0 = encoder_forward(p, src)
    return decoder_forward(p, tgt, hid0, enc, tf_vec)           # (T, B, V)


# --------------------------------- main ------------------------------------ #

if __name__ == "__main__":
    # Lane/sublane-friendly small shapes: B=8 sublanes; emb/hid = 128 lanes,
    # vocab = 256 lanes (gate slices and stores stay tile-aligned).
    SRC_VOCAB, TGT_VOCAB = 256, 256
    EMB, ENC_HID, DEC_HID = 128, 128, 128
    S, T, B = 8, 8, 8

    key = jax.random.PRNGKey(0)
    k_par, k_src, k_tgt = jax.random.split(key, 3)

    params = init_params(k_par, SRC_VOCAB, TGT_VOCAB, EMB, ENC_HID, DEC_HID)
    src = jax.random.randint(k_src, (S, B), 0, SRC_VOCAB, dtype=jnp.int32)
    tgt = jax.random.randint(k_tgt, (T, B), 0, TGT_VOCAB, dtype=jnp.int32)
    src_len = jnp.full((B,), S, jnp.int32)
    tgt_len = jnp.full((B,), T, jnp.int32)

    out = seq2seq_forward(params, src, src_len, tgt, tgt_len,
                          teacher_forcing_ratio=0.5, seed=0)
    out = jax.block_until_ready(out)
    assert out.shape == (T, B, TGT_VOCAB) and out.dtype == jnp.float32
    assert bool(jnp.all(jnp.isfinite(out)))
    print("KERNEL_OK")
</pallas_src>

<mosaic_0001>
module attributes {stable_mosaic.version = 11 : i64} {
  func.func @_encoder_kernel(%arg0: memref<8x8x128xf32, #tpu.memory_space<vmem>>, %arg1: memref<128x384xf32, #tpu.memory_space<vmem>>, %arg2: memref<1x384xf32, #tpu.memory_space<vmem>>, %arg3: memref<128x384xf32, #tpu.memory_space<vmem>>, %arg4: memref<1x384xf32, #tpu.memory_space<vmem>>, %arg5: memref<128x384xf32, #tpu.memory_space<vmem>>, %arg6: memref<1x384xf32, #tpu.memory_space<vmem>>, %arg7: memref<128x384xf32, #tpu.memory_space<vmem>>, %arg8: memref<1x384xf32, #tpu.memory_space<vmem>>, %arg9: memref<128x128xf32, #tpu.memory_space<vmem>>, %arg10: memref<128x128xf32, #tpu.memory_space<vmem>>, %arg11: memref<1x128xf32, #tpu.memory_space<vmem>>, %arg12: memref<8x8x256xf32, #tpu.memory_space<vmem>>, %arg13: memref<8x128xf32, #tpu.memory_space<vmem>>, %arg14: memref<8x8x384xf32, #tpu.memory_space<vmem>>, %arg15: memref<8x8x384xf32, #tpu.memory_space<vmem>>, %arg16: memref<8x8x128xf32, #tpu.memory_space<vmem>>) attributes {dimension_semantics = [], scalar_prefetch = 0 : i64, scratch_operands = 3 : i64, tpu.core_type = #tpu.core_type<tc>} {
    %c0 = arith.constant 0 : index
    %c0_0 = arith.constant 0 : index
    %c0_1 = arith.constant 0 : index
    %0 = vector.load %arg0[%c0, %c0_0, %c0_1] : memref<8x8x128xf32, #tpu.memory_space<vmem>>, vector<8x8x128xf32>
    %1 = vector.shape_cast %0 : vector<8x8x128xf32> to vector<64x128xf32>
    %c0_2 = arith.constant 0 : index
    %c0_3 = arith.constant 0 : index
    %2 = vector.load %arg1[%c0_2, %c0_3] : memref<128x384xf32, #tpu.memory_space<vmem>>, vector<128x384xf32>
    %cst = arith.constant dense<0.000000e+00> : vector<64x384xf32>
    %3 = tpu.matmul %1, %2, %cst {dimension_numbers = #tpu.dot_dimension_numbers<[1], [0], [0], [1], [0, 0, 1, 1], [], []>} : vector<64x128xf32>, vector<128x384xf32>, vector<64x384xf32> -> vector<64x384xf32>
    %c0_4 = arith.constant 0 : index
    %c0_5 = arith.constant 0 : index
    %4 = vector.load %arg2[%c0_4, %c0_5] : memref<1x384xf32, #tpu.memory_space<vmem>>, vector<1x384xf32>
    %5 = vector.broadcast %4 : vector<1x384xf32> to vector<64x384xf32>
    %6 = arith.addf %3, %5 : vector<64x384xf32>
    %7 = vector.shape_cast %6 : vector<64x384xf32> to vector<8x8x384xf32>
    %c0_6 = arith.constant 0 : index
    %c0_7 = arith.constant 0 : index
    %c0_8 = arith.constant 0 : index
    %8 = vector.load %arg14[%c0_6, %c0_7, %c0_8] : memref<8x8x384xf32, #tpu.memory_space<vmem>>, vector<8x8x384xf32>
    tpu.vector_store %arg14[%c0_6, %c0_7, %c0_8], %7 {strides = array<i32>} : memref<8x8x384xf32, #tpu.memory_space<vmem>>, vector<8x8x384xf32>,
    %c0_9 = arith.constant 0 : index
    %c0_10 = arith.constant 0 : index
    %9 = vector.load %arg5[%c0_9, %c0_10] : memref<128x384xf32, #tpu.memory_space<vmem>>, vector<128x384xf32>
    %cst_11 = arith.constant dense<0.000000e+00> : vector<64x384xf32>
    %10 = tpu.matmul %1, %9, %cst_11 {dimension_numbers = #tpu.dot_dimension_numbers<[1], [0], [0], [1], [0, 0, 1, 1], [], []>} : vector<64x128xf32>, vector<128x384xf32>, vector<64x384xf32> -> vector<64x384xf32>
    %c0_12 = arith.constant 0 : index
    %c0_13 = arith.constant 0 : index
    %11 = vector.load %arg6[%c0_12, %c0_13] : memref<1x384xf32, #tpu.memory_space<vmem>>, vector<1x384xf32>
    %12 = vector.broadcast %11 : vector<1x384xf32> to vector<64x384xf32>
    %13 = arith.addf %10, %12 : vector<64x384xf32>
    %14 = vector.shape_cast %13 : vector<64x384xf32> to vector<8x8x384xf32>
    %c0_14 = arith.constant 0 : index
    %c0_15 = arith.constant 0 : index
    %c0_16 = arith.constant 0 : index
    %15 = vector.load %arg15[%c0_14, %c0_15, %c0_16] : memref<8x8x384xf32, #tpu.memory_space<vmem>>, vector<8x8x384xf32>
    tpu.vector_store %arg15[%c0_14, %c0_15, %c0_16], %14 {strides = array<i32>} : memref<8x8x384xf32, #tpu.memory_space<vmem>>, vector<8x8x384xf32>,
    %cst_17 = arith.constant 0.000000e+00 : f32
    %16 = vector.broadcast %cst_17 : f32 to vector<8x128xf32>
    %c0_i32 = arith.constant 0 : i32
    %c8_i32 = arith.constant 8 : i32
    %17 = arith.addi %c0_i32, %c8_i32 : i32
    %c1_i32 = arith.constant 1 : i32
    %18 = scf.for %arg17 = %c0_i32 to %17 step %c1_i32 iter_args(%arg18 = %16) -> (vector<8x128xf32>)  : i32 {
      %32 = arith.index_cast %arg17 : i32 to index
      %c0_34 = arith.constant 0 : index
      %c0_35 = arith.constant 0 : index
      %33 = vector.load %arg14[%32, %c0_34, %c0_35] : memref<8x8x384xf32, #tpu.memory_space<vmem>>, vector<1x8x384xf32>
      %34 = vector.shape_cast %33 : vector<1x8x384xf32> to vector<8x384xf32>
      %c0_36 = arith.constant 0 : index
      %c0_37 = arith.constant 0 : index
      %35 = vector.load %arg3[%c0_36, %c0_37] : memref<128x384xf32, #tpu.memory_space<vmem>>, vector<128x384xf32>
      %c0_38 = arith.constant 0 : index
      %c0_39 = arith.constant 0 : index
      %36 = vector.load %arg4[%c0_38, %c0_39] : memref<1x384xf32, #tpu.memory_space<vmem>>, vector<1x384xf32>
      %cst_40 = arith.constant dense<0.000000e+00> : vector<8x384xf32>
      %37 = tpu.matmul %arg18, %35, %cst_40 {dimension_numbers = #tpu.dot_dimension_numbers<[1], [0], [0], [1], [0, 0, 1, 1], [], []>} : vector<8x128xf32>, vector<128x384xf32>, vector<8x384xf32> -> vector<8x384xf32>
      %38 = vector.broadcast %36 : vector<1x384xf32> to vector<8x384xf32>
      %39 = arith.addf %37, %38 : vector<8x384xf32>
      %40 = vector.extract_strided_slice %34 {offsets = [0, 0], sizes = [8, 128], strides = [1, 1]} : vector<8x384xf32> to vector<8x128xf32>
      %41 = vector.extract_strided_slice %39 {offsets = [0, 0], sizes = [8, 128], strides = [1, 1]} : vector<8x384xf32> to vector<8x128xf32>
      %42 = arith.addf %40, %41 : vector<8x128xf32>
      %43 = arith.negf %42 : vector<8x128xf32>
      %44 = math.exp %43 : vector<8x128xf32>
      %cst_41 = arith.constant 1.000000e+00 : f32
      %45 = vector.broadcast %cst_41 : f32 to vector<8x128xf32>
      %46 = arith.addf %45, %44 : vector<8x128xf32>
      %47 = arith.divf %45, %46 : vector<8x128xf32>
      %48 = vector.extract_strided_slice %34 {offsets = [0, 128], sizes = [8, 128], strides = [1, 1]} : vector<8x384xf32> to vector<8x128xf32>
      %49 = vector.extract_strided_slice %39 {offsets = [0, 128], sizes = [8, 128], strides = [1, 1]} : vector<8x384xf32> to vector<8x128xf32>
      %50 = arith.addf %48, %49 : vector<8x128xf32>
      %51 = arith.negf %50 : vector<8x128xf32>
      %52 = math.exp %51 : vector<8x128xf32>
      %cst_42 = arith.constant 1.000000e+00 : f32
      %53 = vector.broadcast %cst_42 : f32 to vector<8x128xf32>
      %54 = arith.addf %53, %52 : vector<8x128xf32>
      %55 = arith.divf %53, %54 : vector<8x128xf32>
      %56 = vector.extract_strided_slice %34 {offsets = [0, 256], sizes = [8, 128], strides = [1, 1]} : vector<8x384xf32> to vector<8x128xf32>
      %57 = vector.extract_strided_slice %39 {offsets = [0, 256], sizes = [8, 128], strides = [1, 1]} : vector<8x384xf32> to vector<8x128xf32>
      %58 = arith.mulf %47, %57 : vector<8x128xf32>
      %59 = arith.addf %56, %58 : vector<8x128xf32>
      %60 = math.tanh %59 : vector<8x128xf32>
      %cst_43 = arith.constant 1.000000e+00 : f32
      %61 = vector.broadcast %cst_43 : f32 to vector<8x128xf32>
      %62 = arith.subf %61, %55 : vector<8x128xf32>
      %63 = arith.mulf %62, %60 : vector<8x128xf32>
      %64 = arith.mulf %55, %arg18 : vector<8x128xf32>
      %65 = arith.addf %63, %64 : vector<8x128xf32>
      %66 = arith.index_cast %arg17 : i32 to index
      %c0_44 = arith.constant 0 : index
      %c0_45 = arith.constant 0 : index
      %67 = vector.load %arg16[%66, %c0_44, %c0_45] : memref<8x8x128xf32, #tpu.memory_space<vmem>>, vector<1x8x128xf32>
      %68 = vector.shape_cast %67 : vector<1x8x128xf32> to vector<8x128xf32>
      %69 = vector.shape_cast %65 : vector<8x128xf32> to vector<1x8x128xf32>
      tpu.vector_store %arg16[%66, %c0_44, %c0_45], %69 {strides = array<i32>} : memref<8x8x128xf32, #tpu.memory_space<vmem>>, vector<1x8x128xf32>,
      scf.yield %65 : vector<8x128xf32>
    }
    %c8_i32_18 = arith.constant 8 : i32
    %cst_19 = arith.constant 0.000000e+00 : f32
    %19 = vector.broadcast %cst_19 : f32 to vector<8x128xf32>
    %c0_i32_20 = arith.constant 0 : i32
    %c8_i32_21 = arith.constant 8 : i32
    %20 = arith.addi %c0_i32_20, %c8_i32_21 : i32
    %c1_i32_22 = arith.constant 1 : i32
    %21 = scf.for %arg17 = %c0_i32_20 to %20 step %c1_i32_22 iter_args(%arg18 = %19) -> (vector<8x128xf32>)  : i32 {
      %c7_i32 = arith.constant 7 : i32
      %32 = arith.subi %c7_i32, %arg17 : i32
      %33 = arith.index_cast %32 : i32 to index
      %c0_34 = arith.constant 0 : index
      %c0_35 = arith.constant 0 : index
      %34 = vector.load %arg15[%33, %c0_34, %c0_35] : memref<8x8x384xf32, #tpu.memory_space<vmem>>, vector<1x8x384xf32>
      %35 = vector.shape_cast %34 : vector<1x8x384xf32> to vector<8x384xf32>
      %c0_36 = arith.constant 0 : index
      %c0_37 = arith.constant 0 : index
      %36 = vector.load %arg7[%c0_36, %c0_37] : memref<128x384xf32, #tpu.memory_space<vmem>>, vector<128x384xf32>
      %c0_38 = arith.constant 0 : index
      %c0_39 = arith.constant 0 : index
      %37 = vector.load %arg8[%c0_38, %c0_39] : memref<1x384xf32, #tpu.memory_space<vmem>>, vector<1x384xf32>
      %cst_40 = arith.constant dense<0.000000e+00> : vector<8x384xf32>
      %38 = tpu.matmul %arg18, %36, %cst_40 {dimension_numbers = #tpu.dot_dimension_numbers<[1], [0], [0], [1], [0, 0, 1, 1], [], []>} : vector<8x128xf32>, vector<128x384xf32>, vector<8x384xf32> -> vector<8x384xf32>
      %39 = vector.broadcast %37 : vector<1x384xf32> to vector<8x384xf32>
      %40 = arith.addf %38, %39 : vector<8x384xf32>
      %41 = vector.extract_strided_slice %35 {offsets = [0, 0], sizes = [8, 128], strides = [1, 1]} : vector<8x384xf32> to vector<8x128xf32>
      %42 = vector.extract_strided_slice %40 {offsets = [0, 0], sizes = [8, 128], strides = [1, 1]} : vector<8x384xf32> to vector<8x128xf32>
      %43 = arith.addf %41, %42 : vector<8x128xf32>
      %44 = arith.negf %43 : vector<8x128xf32>
      %45 = math.exp %44 : vector<8x128xf32>
      %cst_41 = arith.constant 1.000000e+00 : f32
      %46 = vector.broadcast %cst_41 : f32 to vector<8x128xf32>
      %47 = arith.addf %46, %45 : vector<8x128xf32>
      %48 = arith.divf %46, %47 : vector<8x128xf32>
      %49 = vector.extract_strided_slice %35 {offsets = [0, 128], sizes = [8, 128], strides = [1, 1]} : vector<8x384xf32> to vector<8x128xf32>
      %50 = vector.extract_strided_slice %40 {offsets = [0, 128], sizes = [8, 128], strides = [1, 1]} : vector<8x384xf32> to vector<8x128xf32>
      %51 = arith.addf %49, %50 : vector<8x128xf32>
      %52 = arith.negf %51 : vector<8x128xf32>
      %53 = math.exp %52 : vector<8x128xf32>
      %cst_42 = arith.constant 1.000000e+00 : f32
      %54 = vector.broadcast %cst_42 : f32 to vector<8x128xf32>
      %55 = arith.addf %54, %53 : vector<8x128xf32>
      %56 = arith.divf %54, %55 : vector<8x128xf32>
      %57 = vector.extract_strided_slice %35 {offsets = [0, 256], sizes = [8, 128], strides = [1, 1]} : vector<8x384xf32> to vector<8x128xf32>
      %58 = vector.extract_strided_slice %40 {offsets = [0, 256], sizes = [8, 128], strides = [1, 1]} : vector<8x384xf32> to vector<8x128xf32>
      %59 = arith.mulf %48, %58 : vector<8x128xf32>
      %60 = arith.addf %57, %59 : vector<8x128xf32>
      %61 = math.tanh %60 : vector<8x128xf32>
      %cst_43 = arith.constant 1.000000e+00 : f32
      %62 = vector.broadcast %cst_43 : f32 to vector<8x128xf32>
      %63 = arith.subf %62, %56 : vector<8x128xf32>
      %64 = arith.mulf %63, %61 : vector<8x128xf32>
      %65 = arith.mulf %56, %arg18 : vector<8x128xf32>
      %66 = arith.addf %64, %65 : vector<8x128xf32>
      %67 = arith.index_cast %32 : i32 to index
      %c0_44 = arith.constant 0 : index
      %c0_45 = arith.constant 0 : index
      %68 = vector.load %arg16[%67, %c0_44, %c0_45] : memref<8x8x128xf32, #tpu.memory_space<vmem>>, vector<1x8x128xf32>
      %69 = vector.shape_cast %68 : vector<1x8x128xf32> to vector<8x128xf32>
      %70 = tpu.concatenate %69, %66 in 1 : vector<8x128xf32>, vector<8x128xf32> -> vector<8x256xf32>
      %71 = arith.index_cast %32 : i32 to index
      %c0_46 = arith.constant 0 : index
      %c0_47 = arith.constant 0 : index
      %72 = vector.load %arg12[%71, %c0_46, %c0_47] : memref<8x8x256xf32, #tpu.memory_space<vmem>>, vector<1x8x256xf32>
      %73 = vector.shape_cast %72 : vector<1x8x256xf32> to vector<8x256xf32>
      %74 = vector.shape_cast %70 : vector<8x256xf32> to vector<1x8x256xf32>
      tpu.vector_store %arg12[%71, %c0_46, %c0_47], %74 {strides = array<i32>} : memref<8x8x256xf32, #tpu.memory_space<vmem>>, vector<1x8x256xf32>,
      scf.yield %66 : vector<8x128xf32>
    }
    %c8_i32_23 = arith.constant 8 : i32
    %c0_24 = arith.constant 0 : index
    %c0_25 = arith.constant 0 : index
    %22 = vector.load %arg9[%c0_24, %c0_25] : memref<128x128xf32, #tpu.memory_space<vmem>>, vector<128x128xf32>
    %cst_26 = arith.constant dense<0.000000e+00> : vector<8x128xf32>
    %23 = tpu.matmul %18, %22, %cst_26 {dimension_numbers = #tpu.dot_dimension_numbers<[1], [0], [0], [1], [0, 0, 1, 1], [], []>} : vector<8x128xf32>, vector<128x128xf32>, vector<8x128xf32> -> vector<8x128xf32>
    %c0_27 = arith.constant 0 : index
    %c0_28 = arith.constant 0 : index
    %24 = vector.load %arg10[%c0_27, %c0_28] : memref<128x128xf32, #tpu.memory_space<vmem>>, vector<128x128xf32>
    %cst_29 = arith.constant dense<0.000000e+00> : vector<8x128xf32>
    %25 = tpu.matmul %21, %24, %cst_29 {dimension_numbers = #tpu.dot_dimension_numbers<[1], [0], [0], [1], [0, 0, 1, 1], [], []>} : vector<8x128xf32>, vector<128x128xf32>, vector<8x128xf32> -> vector<8x128xf32>
    %26 = arith.addf %23, %25 : vector<8x128xf32>
    %c0_30 = arith.constant 0 : index
    %c0_31 = arith.constant 0 : index
    %27 = vector.load %arg11[%c0_30, %c0_31] : memref<1x128xf32, #tpu.memory_space<vmem>>, vector<1x128xf32>
    %28 = vector.broadcast %27 : vector<1x128xf32> to vector<8x128xf32>
    %29 = arith.addf %26, %28 : vector<8x128xf32>
    %30 = math.tanh %29 : vector<8x128xf32>
    %c0_32 = arith.constant 0 : index
    %c0_33 = arith.constant 0 : index
    %31 = vector.load %arg13[%c0_32, %c0_33] : memref<8x128xf32, #tpu.memory_space<vmem>>, vector<8x128xf32>
    tpu.vector_store %arg13[%c0_32, %c0_33], %30 {strides = array<i32>} : memref<8x128xf32, #tpu.memory_space<vmem>>, vector<8x128xf32>,
    return
  }
}

</mosaic_0001>

<llo_original>
// kernel: tpu_custom_call.1
$region0: #{tpu_custom_call.1}
  #allocation0 [shape = 'u32[]', space=smem, size = 0x4, offset = 0x4, fixed_abs, tag = 'smem constant byte address 0x4 - core index']
  #allocation1 [shape = 'u32[144,128]{1,0:T(1,128)}', space=vmem, size = 0x12000, scoped, tag = 'internal scratch']
  #allocation2 [shape = 'f32[8,8,384]{2,1,0:T(8,128)}', space=vmem, size = 0x18000, scoped, tag = 'scratch operand']
  #allocation3 [shape = 'f32[8,8,384]{2,1,0:T(8,128)}', space=vmem, size = 0x18000, scoped, tag = 'scratch operand']
  #allocation4 [shape = 'f32[8,8,128]{2,1,0:T(8,128)}', space=vmem, size = 0x8000, scoped, tag = 'scratch operand']
  %s0 = inlined_call_operand.hbm [shape: f32[8,8,128], index: 0, kind: input, shape index: {}]
  %s1 = inlined_call_operand.hbm [shape: f32[128,384], index: 1, kind: input, shape index: {}]
  %s2 = inlined_call_operand.vmem [shape: f32[1,384], index: 2, kind: input, shape index: {}]
  %s3 = inlined_call_operand.hbm [shape: f32[128,384], index: 3, kind: input, shape index: {}]
  %s4 = inlined_call_operand.vmem [shape: f32[1,384], index: 4, kind: input, shape index: {}]
  %s5 = inlined_call_operand.hbm [shape: f32[128,384], index: 5, kind: input, shape index: {}]
  %s6 = inlined_call_operand.vmem [shape: f32[1,384], index: 6, kind: input, shape index: {}]
  %s7 = inlined_call_operand.hbm [shape: f32[128,384], index: 7, kind: input, shape index: {}]
  %s8 = inlined_call_operand.vmem [shape: f32[1,384], index: 8, kind: input, shape index: {}]
  %s9 = inlined_call_operand.hbm [shape: f32[128,128], index: 9, kind: input, shape index: {}]
  %s10 = inlined_call_operand.hbm [shape: f32[128,128], index: 10, kind: input, shape index: {}]
  %s11 = inlined_call_operand.vmem [shape: f32[1,128], index: 11, kind: input, shape index: {}]
  %s12 = inlined_call_operand.hbm [shape: f32[8,8,256], index: 12, kind: output, shape index: {0}]
  %s13 = inlined_call_operand.hbm [shape: f32[8,128], index: 13, kind: output, shape index: {1}]
  %14 = xla_tuple %s12, %s13
  %s15 = sld [smem:[#allocation0]]
  $region108: #{tpu_custom_call.1} parent=0
    _
  %s17 = ssub.s32 1, %s15
  %s18 = scalar_select 0, %s17, %s15
  $region1: #{tpu_custom_call.1} parent=0
    #allocation5 [shape = 'u8[32768]{0}', space=vmem, size = 0x8000, scoped, tag = 'input window, operand 0, single buffered']
    #allocation6 [shape = 's32[1]{0}', space=sflag, size = 0x4, scoped, tag = 'scoped memory for tpu_custom_call.1']
    #allocation7 [shape = 's32[1]{0}', space=sflag, size = 0x4, scoped, tag = 'scoped memory for tpu_custom_call.1']
    #allocation8 [shape = 'u8[196608]{0}', space=vmem, size = 0x30000, scoped, tag = 'input window, operand 1, single buffered']
    #allocation9 [shape = 's32[1]{0}', space=sflag, size = 0x4, scoped, tag = 'scoped memory for tpu_custom_call.1']
    #allocation10 [shape = 'u8[196608]{0}', space=vmem, size = 0x30000, scoped, tag = 'input window, operand 3, single buffered']
    #allocation11 [shape = 'u8[196608]{0}', space=vmem, size = 0x30000, scoped, tag = 'input window, operand 5, single buffered']
    #allocation12 [shape = 's32[1]{0}', space=sflag, size = 0x4, scoped, tag = 'scoped memory for tpu_custom_call.1']
    #allocation13 [shape = 'u8[196608]{0}', space=vmem, size = 0x30000, scoped, tag = 'input window, operand 7, single buffered']
    #allocation14 [shape = 'u8[65536]{0}', space=vmem, size = 0x10000, scoped, tag = 'input window, operand 9, single buffered']
    #allocation15 [shape = 's32[1]{0}', space=sflag, size = 0x4, scoped, tag = 'scoped memory for tpu_custom_call.1']
    #allocation16 [shape = 'u8[65536]{0}', space=vmem, size = 0x10000, scoped, tag = 'input window, operand 10, single buffered']
    #allocation17 [shape = 'u8[65536]{0}', space=vmem, size = 0x10000, scoped, tag = 'output window, operand 0, single buffered']
    #allocation18 [shape = 'u8[4096]{0}', space=vmem, size = 0x1000, scoped, tag = 'output window, operand 1, single buffered']
    #allocation19 [shape = 's32[1]{0}', space=sflag, size = 0x4, scoped, tag = 'scoped memory for tpu_custom_call.1']
    %19 = vsyncpa [#allocation6], 0
    %20 = vsyncpa [#allocation9], 0
    %21 = vsyncpa [#allocation12], 0
    %22 = vsyncpa [#allocation15], 0
    %23 = vsyncpa [#allocation7], 0
    %24 = vsyncpa [#allocation19], 0
    // Predicated region
    $region2: #{tpu_custom_call.1} parent=1 // pred_check
      _
    $region3: #{tpu_custom_call.1} parent=1 // pred_check_branch
      %26 = sbr.rel (0) target = $region5
    $region4: #{tpu_custom_call.1} parent=1 // pred_region
      %s28 = ssub.s32 1024, 1024
      %29 = vsyncadd [#allocation6], %s28
      %s30 = sshll.u32 [#allocation5], 4
      %s31 = int_to_ptr.vmem [resolvable:$true] %s30
      %36 = dma.hbm_to_vmem [thread:$0]  %s0, 1024, %s31, [#allocation6], 128, 128, 8
    $region5: #{tpu_custom_call.1} parent=1 // pred_fallthru
      _
    // Predicated region
    $region6: #{tpu_custom_call.1} parent=1 // pred_check
      _
    $region7: #{tpu_custom_call.1} parent=1 // pred_check_branch
      %38 = sbr.rel (0) target = $region9
    $region8: #{tpu_custom_call.1} parent=1 // pred_region
      %s40 = ssub.s32 6144, 6144
      %41 = vsyncadd [#allocation9], %s40
      %s42 = sshll.u32 [#allocation8], 4
      %s43 = int_to_ptr.vmem [resolvable:$true] %s42
      %48 = dma.hbm_to_vmem [thread:$0]  %s1, 6144, %s43, [#allocation9], 384, 384, 24
    $region9: #{tpu_custom_call.1} parent=1 // pred_fallthru
      _
    // Predicated region
    $region10: #{tpu_custom_call.1} parent=1 // pred_check
      _
    $region11: #{tpu_custom_call.1} parent=1 // pred_check_branch
      %50 = sbr.rel (0) target = $region13
    $region12: #{tpu_custom_call.1} parent=1 // pred_region
      _
    $region13: #{tpu_custom_call.1} parent=1 // pred_fallthru
      _
    // Predicated region
    $region14: #{tpu_custom_call.1} parent=1 // pred_check
      _
    $region15: #{tpu_custom_call.1} parent=1 // pred_check_branch
      %52 = sbr.rel (0) target = $region17
    $region16: #{tpu_custom_call.1} parent=1 // pred_region
      %s54 = ssub.s32 6144, 6144
      %55 = vsyncadd [#allocation9], %s54
      %s56 = sshll.u32 [#allocation10], 4
      %s57 = int_to_ptr.vmem [resolvable:$true] %s56
      %62 = dma.hbm_to_vmem [thread:$0]  %s3, 6144, %s57, [#allocation9], 384, 384, 24
    $region17: #{tpu_custom_call.1} parent=1 // pred_fallthru
      _
    // Predicated region
    $region18: #{tpu_custom_call.1} parent=1 // pred_check
      _
    $region19: #{tpu_custom_call.1} parent=1 // pred_check_branch
      %64 = sbr.rel (0) target = $region21
    $region20: #{tpu_custom_call.1} parent=1 // pred_region
      _
    $region21: #{tpu_custom_call.1} parent=1 // pred_fallthru
      _
    // Predicated region
    $region22: #{tpu_custom_call.1} parent=1 // pred_check
      _
    $region23: #{tpu_custom_call.1} parent=1 // pred_check_branch
      %66 = sbr.rel (0) target = $region25
    $region24: #{tpu_custom_call.1} parent=1 // pred_region
      %s68 = ssub.s32 6144, 6144
      %69 = vsyncadd [#allocation12], %s68
      %s70 = sshll.u32 [#allocation11], 4
      %s71 = int_to_ptr.vmem [resolvable:$true] %s70
      %76 = dma.hbm_to_vmem [thread:$0]  %s5, 6144, %s71, [#allocation12], 384, 384, 24
    $region25: #{tpu_custom_call.1} parent=1 // pred_fallthru
      _
    // Predicated region
    $region26: #{tpu_custom_call.1} parent=1 // pred_check
      _
    $region27: #{tpu_custom_call.1} parent=1 // pred_check_branch
      %78 = sbr.rel (0) target = $region29
    $region28: #{tpu_custom_call.1} parent=1 // pred_region
      _
    $region29: #{tpu_custom_call.1} parent=1 // pred_fallthru
      _
    // Predicated region
    $region30: #{tpu_custom_call.1} parent=1 // pred_check
      _
    $region31: #{tpu_custom_call.1} parent=1 // pred_check_branch
      %80 = sbr.rel (0) target = $region33
    $region32: #{tpu_custom_call.1} parent=1 // pred_region
      %s82 = ssub.s32 6144, 6144
      %83 = vsyncadd [#allocation12], %s82
      %s84 = sshll.u32 [#allocation13], 4
      %s85 = int_to_ptr.vmem [resolvable:$true] %s84
      %90 = dma.hbm_to_vmem [thread:$0]  %s7, 6144, %s85, [#allocation12], 384, 384, 24
    $region33: #{tpu_custom_call.1} parent=1 // pred_fallthru
      _
    // Predicated region
    $region34: #{tpu_custom_call.1} parent=1 // pred_check
      _
    $region35: #{tpu_custom_call.1} parent=1 // pred_check_branch
      %92 = sbr.rel (0) target = $region37
    $region36: #{tpu_custom_call.1} parent=1 // pred_region
      _
    $region37: #{tpu_custom_call.1} parent=1 // pred_fallthru
      _
    // Predicated region
    $region38: #{tpu_custom_call.1} parent=1 // pred_check
      _
    $region39: #{tpu_custom_call.1} parent=1 // pred_check_branch
      %94 = sbr.rel (0) target = $region41
    $region40: #{tpu_custom_call.1} parent=1 // pred_region
      %s96 = ssub.s32 2048, 2048
      %97 = vsyncadd [#allocation15], %s96
      %s98 = sshll.u32 [#allocation14], 4
      %s99 = int_to_ptr.vmem [resolvable:$true] %s98
      %104 = dma.hbm_to_vmem [thread:$0]  %s9, 2048, %s99, [#allocation15], 128, 128, 8
    $region41: #{tpu_custom_call.1} parent=1 // pred_fallthru
      _
    // Predicated region
    $region42: #{tpu_custom_call.1} parent=1 // pred_check
      _
    $region43: #{tpu_custom_call.1} parent=1 // pred_check_branch
      %106 = sbr.rel (0) target = $region45
    $region44: #{tpu_custom_call.1} parent=1 // pred_region
      %s108 = ssub.s32 2048, 2048
      %109 = vsyncadd [#allocation15], %s108
      %s110 = sshll.u32 [#allocation16], 4
      %s111 = int_to_ptr.vmem [resolvable:$true] %s110
      %116 = dma.hbm_to_vmem [thread:$0]  %s10, 2048, %s111, [#allocation15], 128, 128, 8
    $region45: #{tpu_custom_call.1} parent=1 // pred_fallthru
      _
    // Predicated region
    $region46: #{tpu_custom_call.1} parent=1 // pred_check
      _
    $region47: #{tpu_custom_call.1} parent=1 // pred_check_branch
      %118 = sbr.rel (0) target = $region49
    $region48: #{tpu_custom_call.1} parent=1 // pred_region
      _
    $region49: #{tpu_custom_call.1} parent=1 // pred_fallthru
      _
    // Predicated region
    $region50: #{tpu_custom_call.1} parent=1 // pred_check
      _
    $region51: #{tpu_custom_call.1} parent=1 // pred_check_branch
      %120 = sbr.rel (0) target = $region53
    $region52: #{tpu_custom_call.1} parent=1 // pred_region
      %121 = dma.done [#allocation6], 1024
    $region53: #{tpu_custom_call.1} parent=1 // pred_fallthru
      _
    // Predicated region
    $region54: #{tpu_custom_call.1} parent=1 // pred_check
      _
    $region55: #{tpu_custom_call.1} parent=1 // pred_check_branch
      %123 = sbr.rel (0) target = $region57
    $region56: #{tpu_custom_call.1} parent=1 // pred_region
      %124 = dma.done [#allocation9], 6144
    $region57: #{tpu_custom_call.1} parent=1 // pred_fallthru
      _
    // Predicated region
    $region58: #{tpu_custom_call.1} parent=1 // pred_check
      _
    $region59: #{tpu_custom_call.1} parent=1 // pred_check_branch
      %126 = sbr.rel (0) target = $region61
    $region60: #{tpu_custom_call.1} parent=1 // pred_region
      %127 = dma.done [#allocation9], 6144
    $region61: #{tpu_custom_call.1} parent=1 // pred_fallthru
      _
    // Predicated region
    $region62: #{tpu_custom_call.1} parent=1 // pred_check
      _
    $region63: #{tpu_custom_call.1} parent=1 // pred_check_branch
      %129 = sbr.rel (0) target = $region65
    $region64: #{tpu_custom_call.1} parent=1 // pred_region
      %130 = dma.done [#allocation12], 6144
    $region65: #{tpu_custom_call.1} parent=1 // pred_fallthru
      _
    // Predicated region
    $region66: #{tpu_custom_call.1} parent=1 // pred_check
      _
    $region67: #{tpu_custom_call.1} parent=1 // pred_check_branch
      %132 = sbr.rel (0) target = $region69
    $region68: #{tpu_custom_call.1} parent=1 // pred_region
      %133 = dma.done [#allocation12], 6144
    $region69: #{tpu_custom_call.1} parent=1 // pred_fallthru
      _
    // Predicated region
    $region70: #{tpu_custom_call.1} parent=1 // pred_check
      _
    $region71: #{tpu_custom_call.1} parent=1 // pred_check_branch
      %135 = sbr.rel (0) target = $region73
    $region72: #{tpu_custom_call.1} parent=1 // pred_region
      %136 = dma.done [#allocation15], 2048
    $region73: #{tpu_custom_call.1} parent=1 // pred_fallthru
      _
    // Predicated region
    $region74: #{tpu_custom_call.1} parent=1 // pred_check
      _
    $region75: #{tpu_custom_call.1} parent=1 // pred_check_branch
      %138 = sbr.rel (0) target = $region77
    $region76: #{tpu_custom_call.1} parent=1 // pred_region
      %139 = dma.done [#allocation15], 2048
    $region77: #{tpu_custom_call.1} parent=1 // pred_fallthru
      _
    %v140 = vld [vmem:[#allocation5] sm:$0xff]
    %v141 = vld [vmem:[#allocation5 + $0x8] sm:$0xff]
    %v142 = vld [vmem:[#allocation5 + $0x10] sm:$0xff]
    %v143 = vld [vmem:[#allocation5 + $0x18] sm:$0xff]
    %v144 = vld [vmem:[#allocation5 + $0x20] sm:$0xff]
    %v145 = vld [vmem:[#allocation5 + $0x28] sm:$0xff]
    %v146 = vld [vmem:[#allocation5 + $0x30] sm:$0xff]
    %v147 = vld [vmem:[#allocation5 + $0x38] sm:$0xff]
    %v148 = vld [vmem:[#allocation8] sm:$0xff]
    %v149 = vld [vmem:[#allocation8 + $0x8] sm:$0xff]
    %v150 = vld [vmem:[#allocation8 + $0x10] sm:$0xff]
    %v151 = vld [vmem:[#allocation8 + $0x18] sm:$0xff]
    %v152 = vld [vmem:[#allocation8 + $0x20] sm:$0xff]
    %v153 = vld [vmem:[#allocation8 + $0x28] sm:$0xff]
    %v154 = vld [vmem:[#allocation8 + $0x30] sm:$0xff]
    %v155 = vld [vmem:[#allocation8 + $0x38] sm:$0xff]
    %v156 = vld [vmem:[#allocation8 + $0x40] sm:$0xff]
    %v157 = vld [vmem:[#allocation8 + $0x48] sm:$0xff]
    %v158 = vld [vmem:[#allocation8 + $0x50] sm:$0xff]
    %v159 = vld [vmem:[#allocation8 + $0x58] sm:$0xff]
    %v160 = vld [vmem:[#allocation8 + $0x60] sm:$0xff]
    %v161 = vld [vmem:[#allocation8 + $0x68] sm:$0xff]
    %v162 = vld [vmem:[#allocation8 + $0x70] sm:$0xff]
    %v163 = vld [vmem:[#allocation8 + $0x78] sm:$0xff]
    %v164 = vld [vmem:[#allocation8 + $0x80] sm:$0xff]
    %v165 = vld [vmem:[#allocation8 + $0x88] sm:$0xff]
    %v166 = vld [vmem:[#allocation8 + $0x90] sm:$0xff]
    %v167 = vld [vmem:[#allocation8 + $0x98] sm:$0xff]
    %v168 = vld [vmem:[#allocation8 + $0xa0] sm:$0xff]
    %v169 = vld [vmem:[#allocation8 + $0xa8] sm:$0xff]
    %v170 = vld [vmem:[#allocation8 + $0xb0] sm:$0xff]
    %v171 = vld [vmem:[#allocation8 + $0xb8] sm:$0xff]
    %v172 = vld [vmem:[#allocation8 + $0xc0] sm:$0xff]
    %v173 = vld [vmem:[#allocation8 + $0xc8] sm:$0xff]
    %v174 = vld [vmem:[#allocation8 + $0xd0] sm:$0xff]
    %v175 = vld [vmem:[#allocation8 + $0xd8] sm:$0xff]
    %v176 = vld [vmem:[#allocation8 + $0xe0] sm:$0xff]
    %v177 = vld [vmem:[#allocation8 + $0xe8] sm:$0xff]
    %v178 = vld [vmem:[#allocation8 + $0xf0] sm:$0xff]
    %v179 = vld [vmem:[#allocation8 + $0xf8] sm:$0xff]
    %v180 = vld [vmem:[#allocation8 + $0x100] sm:$0xff]
    %v181 = vld [vmem:[#allocation8 + $0x108] sm:$0xff]
    %v182 = vld [vmem:[#allocation8 + $0x110] sm:$0xff]
    %v183 = vld [vmem:[#allocation8 + $0x118] sm:$0xff]
    %v184 = vld [vmem:[#allocation8 + $0x120] sm:$0xff]
    %v185 = vld [vmem:[#allocation8 + $0x128] sm:$0xff]
    %v186 = vld [vmem:[#allocation8 + $0x130] sm:$0xff]
    %v187 = vld [vmem:[#allocation8 + $0x138] sm:$0xff]
    %v188 = vld [vmem:[#allocation8 + $0x140] sm:$0xff]
    %v189 = vld [vmem:[#allocation8 + $0x148] sm:$0xff]
    %v190 = vld [vmem:[#allocation8 + $0x150] sm:$0xff]
    %v191 = vld [vmem:[#allocation8 + $0x158] sm:$0xff]
    %v192 = vld [vmem:[#allocation8 + $0x160] sm:$0xff]
    %v193 = vld [vmem:[#allocation8 + $0x168] sm:$0xff]
    %v194 = vld [vmem:[#allocation8 + $0x170] sm:$0xff]
    %v195 = vld [vmem:[#allocation8 + $0x178] sm:$0xff]
    %v196 = vld [vmem:[%s2] sm:$0x7]
    %v198 = vlaneseq
    %v199 = vshrl.u32 %v198, 7
    %v200 = vsub.s32 0, %v199
    %v201 = vrot.slane %v196, %v200
    %v202 = vlaneseq
    %v203 = vshrl.u32 %v202, 7
    %v204 = vsub.s32 1, %v203
    %v205 = vrot.slane %v196, %v204
    %v206 = vlaneseq
    %v207 = vshrl.u32 %v206, 7
    %v208 = vsub.s32 2, %v207
    %v209 = vrot.slane %v196, %v208
    %213 = vmatprep.subr.mxu0 %v194
    %214 = vmatpush1.msra.mxu0 %v193
    %215 = vmatprep.subr.mxu0 %v191
    %216 = vmatpush1.msra.mxu0 %v190
    %217 = vmatprep.subr.mxu0 %v188
    %218 = vmatpush1.msra.mxu0 %v187
    %219 = vmatprep.subr.mxu0 %v185
    %220 = vmatpush1.msra.mxu0 %v184
    %221 = vmatprep.subr.mxu0 %v182
    %222 = vmatpush1.msra.mxu0 %v181
    %223 = vmatprep.subr.mxu0 %v179
    %224 = vmatpush1.msra.mxu0 %v178
    %225 = vmatprep.subr.mxu0 %v176
    %226 = vmatpush1.msra.mxu0 %v175
    %227 = vmatprep.subr.mxu0 %v173
    %228 = vmatpush1.msra.mxu0 %v172
    %229 = vmatprep.subr.mxu0 %v170
    %230 = vmatpush1.msra.mxu0 %v169
    %231 = vmatprep.subr.mxu0 %v167
    %232 = vmatpush1.msra.mxu0 %v166
    %233 = vmatprep.subr.mxu0 %v164
    %234 = vmatpush1.msra.mxu0 %v163
    %235 = vmatprep.subr.mxu0 %v161
    %236 = vmatpush1.msra.mxu0 %v160
    %237 = vmatprep.subr.mxu0 %v158
    %238 = vmatpush1.msra.mxu0 %v157
    %239 = vmatprep.subr.mxu0 %v155
    %240 = vmatpush1.msra.mxu0 %v154
    %241 = vmatprep.subr.mxu0 %v152
    %242 = vmatpush1.msra.mxu0 %v151
    %243 = vmatprep.subr.mxu0 %v149
    %244 = vmatpush1.msra.mxu0 %v148
    %245 = vmatprep.subr.mxu0 0.0
    %246 = vmatpush2.msra.mxu0 0.0
    %247 = vmatprep.subr.mxu0 0.0
    %248 = vmatpush2.msra.mxu0 0.0
    %249 = vmatprep.subr.mxu0 0.0
    %250 = vmatpush2.msra.mxu0 0.0
    %251 = vmatprep.subr.mxu0 0.0
    %252 = vmatpush2.msra.mxu0 0.0
    %253 = vmatprep.subr.mxu0 0.0
    %254 = vmatpush2.msra.mxu0 0.0
    %255 = vmatprep.subr.mxu0 0.0
    %256 = vmatpush2.msra.mxu0 0.0
    %257 = vmatprep.subr.mxu0 0.0
    %258 = vmatpush2.msra.mxu0 0.0
    %259 = vmatprep.subr.mxu0 0.0
    %260 = vmatpush2.msra.mxu0 0.0
    %261 = vmatprep.subr.mxu0 0.0
    %262 = vmatpush2.msra.mxu0 0.0
    %263 = vmatprep.subr.mxu0 0.0
    %264 = vmatpush2.msra.mxu0 0.0
    %265 = vmatprep.subr.mxu0 0.0
    %266 = vmatpush2.msra.mxu0 0.0
    %267 = vmatprep.subr.mxu0 0.0
    %268 = vmatpush2.msra.mxu0 0.0
    %269 = vmatprep.subr.mxu0 0.0
    %270 = vmatpush2.msra.mxu0 0.0
    %271 = vmatprep.subr.mxu0 0.0
    %272 = vmatpush2.msra.mxu0 0.0
    %273 = vmatprep.subr.mxu0 0.0
    %274 = vmatpush2.msra.mxu0 0.0
    %275 = vmatprep.subr.mxu0 0.0
    %276 = vmatpush2.msra.mxu0 0.0
    %277 = vmatprep.mubr.f32.mxu0 0.0
    %278 = vmatmul.mubr.f32.gmra.mxu0 %v140
    %v279 = vpop.f32.mrf.mxu0
    %v280 = vadd.f32 %v201, %v279
    %v281 = vpop.f32.mrf.mxu0
    %v282 = vadd.f32 %v205, %v281
    %283 = vmatprep.mubr.f32.mxu0 0.0
    %284 = vmatmul.mubr.f32.gmra.mxu0 %v141
    %v285 = vpop.f32.mrf.mxu0
    %v286 = vadd.f32 %v201, %v285
    %v287 = vpop.f32.mrf.mxu0
    %v288 = vadd.f32 %v205, %v287
    %289 = vmatprep.mubr.f32.mxu0 0.0
    %290 = vmatmul.mubr.f32.gmra.mxu0 %v142
    %v291 = vpop.f32.mrf.mxu0
    %v292 = vadd.f32 %v201, %v291
    %v293 = vpop.f32.mrf.mxu0
    %v294 = vadd.f32 %v205, %v293
    %295 = vmatprep.mubr.f32.mxu0 0.0
    %296 = vmatmul.mubr.f32.gmra.mxu0 %v143
    %v297 = vpop.f32.mrf.mxu0
    %v298 = vadd.f32 %v201, %v297
    %v299 = vpop.f32.mrf.mxu0
    %v300 = vadd.f32 %v205, %v299
    %301 = vmatprep.mubr.f32.mxu0 0.0
    %302 = vmatmul.mubr.f32.gmra.mxu0 %v144
    %v303 = vpop.f32.mrf.mxu0
    %v304 = vadd.f32 %v201, %v303
    %v305 = vpop.f32.mrf.mxu0
    %v306 = vadd.f32 %v205, %v305
    %307 = vmatprep.mubr.f32.mxu0 0.0
    %308 = vmatmul.mubr.f32.gmra.mxu0 %v145
    %v309 = vpop.f32.mrf.mxu0
    %v310 = vadd.f32 %v201, %v309
    %v311 = vpop.f32.mrf.mxu0
    %v312 = vadd.f32 %v205, %v311
    %313 = vmatprep.mubr.f32.mxu0 0.0
    %314 = vmatmul.mubr.f32.gmra.mxu0 %v146
    %v315 = vpop.f32.mrf.mxu0
    %v316 = vadd.f32 %v201, %v315
    %v317 = vpop.f32.mrf.mxu0
    %v318 = vadd.f32 %v205, %v317
    %319 = vmatprep.mubr.f32.mxu0 0.0
    %320 = vmatmul.mubr.f32.gmra.mxu0 %v147
    %v321 = vpop.f32.mrf.mxu0
    %v322 = vadd.f32 %v201, %v321
    %v323 = vpop.f32.mrf.mxu0
    %v324 = vadd.f32 %v205, %v323
    %325 = vdwg.mxu0
    %326 = vmatprep.subr.mxu0 0.0
    %327 = vmatpush1.msra.mxu0 %v195
    %328 = vmatprep.subr.mxu0 0.0
    %329 = vmatpush1.msra.mxu0 %v192
    %330 = vmatprep.subr.mxu0 0.0
    %331 = vmatpush1.msra.mxu0 %v189
    %332 = vmatprep.subr.mxu0 0.0
    %333 = vmatpush1.msra.mxu0 %v186
    %334 = vmatprep.subr.mxu0 0.0
    %335 = vmatpush1.msra.mxu0 %v183
    %336 = vmatprep.subr.mxu0 0.0
    %337 = vmatpush1.msra.mxu0 %v180
    %338 = vmatprep.subr.mxu0 0.0
    %339 = vmatpush1.msra.mxu0 %v177
    %340 = vmatprep.subr.mxu0 0.0
    %341 = vmatpush1.msra.mxu0 %v174
    %342 = vmatprep.subr.mxu0 0.0
    %343 = vmatpush1.msra.mxu0 %v171
    %344 = vmatprep.subr.mxu0 0.0
    %345 = vmatpush1.msra.mxu0 %v168
    %346 = vmatprep.subr.mxu0 0.0
    %347 = vmatpush1.msra.mxu0 %v165
    %348 = vmatprep.subr.mxu0 0.0
    %349 = vmatpush1.msra.mxu0 %v162
    %350 = vmatprep.subr.mxu0 0.0
    %351 = vmatpush1.msra.mxu0 %v159
    %352 = vmatprep.subr.mxu0 0.0
    %353 = vmatpush1.msra.mxu0 %v156
    %354 = vmatprep.subr.mxu0 0.0
    %355 = vmatpush1.msra.mxu0 %v153
    %356 = vmatprep.subr.mxu0 0.0
    %357 = vmatpush1.msra.mxu0 %v150
    %358 = vmatprep.subr.mxu0 0.0
    %359 = vmatpush2.msra.mxu0 0.0
    %360 = vmatprep.subr.mxu0 0.0
    %361 = vmatpush2.msra.mxu0 0.0
    %362 = vmatprep.subr.mxu0 0.0
    %363 = vmatpush2.msra.mxu0 0.0
    %364 = vmatprep.subr.mxu0 0.0
    %365 = vmatpush2.msra.mxu0 0.0
    %366 = vmatprep.subr.mxu0 0.0
    %367 = vmatpush2.msra.mxu0 0.0
    %368 = vmatprep.subr.mxu0 0.0
    %369 = vmatpush2.msra.mxu0 0.0
    %370 = vmatprep.subr.mxu0 0.0
    %371 = vmatpush2.msra.mxu0 0.0
    %372 = vmatprep.subr.mxu0 0.0
    %373 = vmatpush2.msra.mxu0 0.0
    %374 = vmatprep.subr.mxu0 0.0
    %375 = vmatpush2.msra.mxu0 0.0
    %376 = vmatprep.subr.mxu0 0.0
    %377 = vmatpush2.msra.mxu0 0.0
    %378 = vmatprep.subr.mxu0 0.0
    %379 = vmatpush2.msra.mxu0 0.0
    %380 = vmatprep.subr.mxu0 0.0
    %381 = vmatpush2.msra.mxu0 0.0
    %382 = vmatprep.subr.mxu0 0.0
    %383 = vmatpush2.msra.mxu0 0.0
    %384 = vmatprep.subr.mxu0 0.0
    %385 = vmatpush2.msra.mxu0 0.0
    %386 = vmatprep.subr.mxu0 0.0
    %387 = vmatpush2.msra.mxu0 0.0
    %388 = vmatprep.subr.mxu0 0.0
    %389 = vmatpush2.msra.mxu0 0.0
    %390 = vmatprep.mubr.f32.mxu0 0.0
    %391 = vmatmul.mubr.f32.gmra.mxu0 %v140
    %v392 = vpop.f32.mrf.mxu0
    %v393 = vadd.f32 %v209, %v392
    %v394 = vpop.f32.mrf.mxu0
    %395 = vmatprep.mubr.f32.mxu0 0.0
    %396 = vmatmul.mubr.f32.gmra.mxu0 %v141
    %v397 = vpop.f32.mrf.mxu0
    %v398 = vadd.f32 %v209, %v397
    %v399 = vpop.f32.mrf.mxu0
    %400 = vmatprep.mubr.f32.mxu0 0.0
    %401 = vmatmul.mubr.f32.gmra.mxu0 %v142
    %v402 = vpop.f32.mrf.mxu0
    %v403 = vadd.f32 %v209, %v402
    %v404 = vpop.f32.mrf.mxu0
    %405 = vmatprep.mubr.f32.mxu0 0.0
    %406 = vmatmul.mubr.f32.gmra.mxu0 %v143
    %v407 = vpop.f32.mrf.mxu0
    %v408 = vadd.f32 %v209, %v407
    %v409 = vpop.f32.mrf.mxu0
    %410 = vmatprep.mubr.f32.mxu0 0.0
    %411 = vmatmul.mubr.f32.gmra.mxu0 %v144
    %v412 = vpop.f32.mrf.mxu0
    %v413 = vadd.f32 %v209, %v412
    %v414 = vpop.f32.mrf.mxu0
    %415 = vmatprep.mubr.f32.mxu0 0.0
    %416 = vmatmul.mubr.f32.gmra.mxu0 %v145
    %v417 = vpop.f32.mrf.mxu0
    %v418 = vadd.f32 %v209, %v417
    %v419 = vpop.f32.mrf.mxu0
    %420 = vmatprep.mubr.f32.mxu0 0.0
    %421 = vmatmul.mubr.f32.gmra.mxu0 %v146
    %v422 = vpop.f32.mrf.mxu0
    %v423 = vadd.f32 %v209, %v422
    %v424 = vpop.f32.mrf.mxu0
    %425 = vmatprep.mubr.f32.mxu0 0.0
    %426 = vmatmul.mubr.f32.gmra.mxu0 %v147
    %v427 = vpop.f32.mrf.mxu0
    %v428 = vadd.f32 %v209, %v427
    %v429 = vpop.f32.mrf.mxu0
    %430 = vdwg.mxu0
    %431 = vst [vmem:[#allocation2] sm:$0xff] %v280
    %432 = vst [vmem:[#allocation2 + $0x8] sm:$0xff] %v282
    %433 = vst [vmem:[#allocation2 + $0x10] sm:$0xff] %v393
    %434 = vst [vmem:[#allocation2 + $0x18] sm:$0xff] %v286
    %435 = vst [vmem:[#allocation2 + $0x20] sm:$0xff] %v288
    %436 = vst [vmem:[#allocation2 + $0x28] sm:$0xff] %v398
    %437 = vst [vmem:[#allocation2 + $0x30] sm:$0xff] %v292
    %438 = vst [vmem:[#allocation2 + $0x38] sm:$0xff] %v294
    %439 = vst [vmem:[#allocation2 + $0x40] sm:$0xff] %v403
    %440 = vst [vmem:[#allocation2 + $0x48] sm:$0xff] %v298
    %441 = vst [vmem:[#allocation2 + $0x50] sm:$0xff] %v300
    %442 = vst [vmem:[#allocation2 + $0x58] sm:$0xff] %v408
    %443 = vst [vmem:[#allocation2 + $0x60] sm:$0xff] %v304
    %444 = vst [vmem:[#allocation2 + $0x68] sm:$0xff] %v306
    %445 = vst [vmem:[#allocation2 + $0x70] sm:$0xff] %v413
    %446 = vst [vmem:[#allocation2 + $0x78] sm:$0xff] %v310
    %447 = vst [vmem:[#allocation2 + $0x80] sm:$0xff] %v312
    %448 = vst [vmem:[#allocation2 + $0x88] sm:$0xff] %v418
    %449 = vst [vmem:[#allocation2 + $0x90] sm:$0xff] %v316
    %450 = vst [vmem:[#allocation2 + $0x98] sm:$0xff] %v318
    %451 = vst [vmem:[#allocation2 + $0xa0] sm:$0xff] %v423
    %452 = vst [vmem:[#allocation2 + $0xa8] sm:$0xff] %v322
    %453 = vst [vmem:[#allocation2 + $0xb0] sm:$0xff] %v324
    %454 = vst [vmem:[#allocation2 + $0xb8] sm:$0xff] %v428
    %v455 = vld [vmem:[#allocation11] sm:$0xff]
    %v456 = vld [vmem:[#allocation11 + $0x8] sm:$0xff]
    %v457 = vld [vmem:[#allocation11 + $0x10] sm:$0xff]
    %v458 = vld [vmem:[#allocation11 + $0x18] sm:$0xff]
    %v459 = vld [vmem:[#allocation11 + $0x20] sm:$0xff]
    %v460 = vld [vmem:[#allocation11 + $0x28] sm:$0xff]
    %v461 = vld [vmem:[#allocation11 + $0x30] sm:$0xff]
    %v462 = vld [vmem:[#allocation11 + $0x38] sm:$0xff]
    %v463 = vld [vmem:[#allocation11 + $0x40] sm:$0xff]
    %v464 = vld [vmem:[#allocation11 + $0x48] sm:$0xff]
    %v465 = vld [vmem:[#allocation11 + $0x50] sm:$0xff]
    %v466 = vld [vmem:[#allocation11 + $0x58] sm:$0xff]
    %v467 = vld [vmem:[#allocation11 + $0x60] sm:$0xff]
    %v468 = vld [vmem:[#allocation11 + $0x68] sm:$0xff]
    %v469 = vld [vmem:[#allocation11 + $0x70] sm:$0xff]
    %v470 = vld [vmem:[#allocation11 + $0x78] sm:$0xff]
    %v471 = vld [vmem:[#allocation11 + $0x80] sm:$0xff]
    %v472 = vld [vmem:[#allocation11 + $0x88] sm:$0xff]
    %v473 = vld [vmem:[#allocation11 + $0x90] sm:$0xff]
    %v474 = vld [vmem:[#allocation11 + $0x98] sm:$0xff]
    %v475 = vld [vmem:[#allocation11 + $0xa0] sm:$0xff]
    %v476 = vld [vmem:[#allocation11 + $0xa8] sm:$0xff]
    %v477 = vld [vmem:[#allocation11 + $0xb0] sm:$0xff]
    %v478 = vld [vmem:[#allocation11 + $0xb8] sm:$0xff]
    %v479 = vld [vmem:[#allocation11 + $0xc0] sm:$0xff]
    %v480 = vld [vmem:[#allocation11 + $0xc8] sm:$0xff]
    %v481 = vld [vmem:[#allocation11 + $0xd0] sm:$0xff]
    %v482 = vld [vmem:[#allocation11 + $0xd8] sm:$0xff]
    %v483 = vld [vmem:[#allocation11 + $0xe0] sm:$0xff]
    %v484 = vld [vmem:[#allocation11 + $0xe8] sm:$0xff]
    %v485 = vld [vmem:[#allocation11 + $0xf0] sm:$0xff]
    %v486 = vld [vmem:[#allocation11 + $0xf8] sm:$0xff]
    %v487 = vld [vmem:[#allocation11 + $0x100] sm:$0xff]
    %v488 = vld [vmem:[#allocation11 + $0x108] sm:$0xff]
    %v489 = vld [vmem:[#allocation11 + $0x110] sm:$0xff]
    %v490 = vld [vmem:[#allocation11 + $0x118] sm:$0xff]
    %v491 = vld [vmem:[#allocation11 + $0x120] sm:$0xff]
    %v492 = vld [vmem:[#allocation11 + $0x128] sm:$0xff]
    %v493 = vld [vmem:[#allocation11 + $0x130] sm:$0xff]
    %v494 = vld [vmem:[#allocation11 + $0x138] sm:$0xff]
    %v495 = vld [vmem:[#allocation11 + $0x140] sm:$0xff]
    %v496 = vld [vmem:[#allocation11 + $0x148] sm:$0xff]
    %v497 = vld [vmem:[#allocation11 + $0x150] sm:$0xff]
    %v498 = vld [vmem:[#allocation11 + $0x158] sm:$0xff]
    %v499 = vld [vmem:[#allocation11 + $0x160] sm:$0xff]
    %v500 = vld [vmem:[#allocation11 + $0x168] sm:$0xff]
    %v501 = vld [vmem:[#allocation11 + $0x170] sm:$0xff]
    %v502 = vld [vmem:[#allocation11 + $0x178] sm:$0xff]
    %v503 = vld [vmem:[%s6] sm:$0x7]
    %v505 = vlaneseq
    %v506 = vshrl.u32 %v505, 7
    %v507 = vsub.s32 0, %v506
    %v508 = vrot.slane %v503, %v507
    %v509 = vlaneseq
    %v510 = vshrl.u32 %v509, 7
    %v511 = vsub.s32 1, %v510
    %v512 = vrot.slane %v503, %v511
    %v513 = vlaneseq
    %v514 = vshrl.u32 %v513, 7
    %v515 = vsub.s32 2, %v514
    %v516 = vrot.slane %v503, %v515
    %520 = vmatprep.subr.mxu0 %v501
    %521 = vmatpush1.msra.mxu0 %v500
    %522 = vmatprep.subr.mxu0 %v498
    %523 = vmatpush1.msra.mxu0 %v497
    %524 = vmatprep.subr.mxu0 %v495
    %525 = vmatpush1.msra.mxu0 %v494
    %526 = vmatprep.subr.mxu0 %v492
    %527 = vmatpush1.msra.mxu0 %v491
    %528 = vmatprep.subr.mxu0 %v489
    %529 = vmatpush1.msra.mxu0 %v488
    %530 = vmatprep.subr.mxu0 %v486
    %531 = vmatpush1.msra.mxu0 %v485
    %532 = vmatprep.subr.mxu0 %v483
    %533 = vmatpush1.msra.mxu0 %v482
    %534 = vmatprep.subr.mxu0 %v480
    %535 = vmatpush1.msra.mxu0 %v479
    %536 = vmatprep.subr.mxu0 %v477
    %537 = vmatpush1.msra.mxu0 %v476
    %538 = vmatprep.subr.mxu0 %v474
    %539 = vmatpush1.msra.mxu0 %v473
    %540 = vmatprep.subr.mxu0 %v471
    %541 = vmatpush1.msra.mxu0 %v470
    %542 = vmatprep.subr.mxu0 %v468
    %543 = vmatpush1.msra.mxu0 %v467
    %544 = vmatprep.subr.mxu0 %v465
    %545 = vmatpush1.msra.mxu0 %v464
    %546 = vmatprep.subr.mxu0 %v462
    %547 = vmatpush1.msra.mxu0 %v461
    %548 = vmatprep.subr.mxu0 %v459
    %549 = vmatpush1.msra.mxu0 %v458
    %550 = vmatprep.subr.mxu0 %v456
    %551 = vmatpush1.msra.mxu0 %v455
    %552 = vmatprep.subr.mxu0 0.0
    %553 = vmatpush2.msra.mxu0 0.0
    %554 = vmatprep.subr.mxu0 0.0
    %555 = vmatpush2.msra.mxu0 0.0
    %556 = vmatprep.subr.mxu0 0.0
    %557 = vmatpush2.msra.mxu0 0.0
    %558 = vmatprep.subr.mxu0 0.0
    %559 = vmatpush2.msra.mxu0 0.0
    %560 = vmatprep.subr.mxu0 0.0
    %561 = vmatpush2.msra.mxu0 0.0
    %562 = vmatprep.subr.mxu0 0.0
    %563 = vmatpush2.msra.mxu0 0.0
    %564 = vmatprep.subr.mxu0 0.0
    %565 = vmatpush2.msra.mxu0 0.0
    %566 = vmatprep.subr.mxu0 0.0
    %567 = vmatpush2.msra.mxu0 0.0
    %568 = vmatprep.subr.mxu0 0.0
    %569 = vmatpush2.msra.mxu0 0.0
    %570 = vmatprep.subr.mxu0 0.0
    %571 = vmatpush2.msra.mxu0 0.0
    %572 = vmatprep.subr.mxu0 0.0
    %573 = vmatpush2.msra.mxu0 0.0
    %574 = vmatprep.subr.mxu0 0.0
    %575 = vmatpush2.msra.mxu0 0.0
    %576 = vmatprep.subr.mxu0 0.0
    %577 = vmatpush2.msra.mxu0 0.0
    %578 = vmatprep.subr.mxu0 0.0
    %579 = vmatpush2.msra.mxu0 0.0
    %580 = vmatprep.subr.mxu0 0.0
    %581 = vmatpush2.msra.mxu0 0.0
    %582 = vmatprep.subr.mxu0 0.0
    %583 = vmatpush2.msra.mxu0 0.0
    %584 = vmatprep.mubr.f32.mxu0 0.0
    %585 = vmatmul.mubr.f32.gmra.mxu0 %v140
    %v586 = vpop.f32.mrf.mxu0
    %v587 = vadd.f32 %v508, %v586
    %v588 = vpop.f32.mrf.mxu0
    %v589 = vadd.f32 %v512, %v588
    %590 = vmatprep.mubr.f32.mxu0 0.0
    %591 = vmatmul.mubr.f32.gmra.mxu0 %v141
    %v592 = vpop.f32.mrf.mxu0
    %v593 = vadd.f32 %v508, %v592
    %v594 = vpop.f32.mrf.mxu0
    %v595 = vadd.f32 %v512, %v594
    %596 = vmatprep.mubr.f32.mxu0 0.0
    %597 = vmatmul.mubr.f32.gmra.mxu0 %v142
    %v598 = vpop.f32.mrf.mxu0
    %v599 = vadd.f32 %v508, %v598
    %v600 = vpop.f32.mrf.mxu0
    %v601 = vadd.f32 %v512, %v600
    %602 = vmatprep.mubr.f32.mxu0 0.0
    %603 = vmatmul.mubr.f32.gmra.mxu0 %v143
    %v604 = vpop.f32.mrf.mxu0
    %v605 = vadd.f32 %v508, %v604
    %v606 = vpop.f32.mrf.mxu0
    %v607 = vadd.f32 %v512, %v606
    %608 = vmatprep.mubr.f32.mxu0 0.0
    %609 = vmatmul.mubr.f32.gmra.mxu0 %v144
    %v610 = vpop.f32.mrf.mxu0
    %v611 = vadd.f32 %v508, %v610
    %v612 = vpop.f32.mrf.mxu0
    %v613 = vadd.f32 %v512, %v612
    %614 = vmatprep.mubr.f32.mxu0 0.0
    %615 = vmatmul.mubr.f32.gmra.mxu0 %v145
    %v616 = vpop.f32.mrf.mxu0
    %v617 = vadd.f32 %v508, %v616
    %v618 = vpop.f32.mrf.mxu0
    %v619 = vadd.f32 %v512, %v618
    %620 = vmatprep.mubr.f32.mxu0 0.0
    %621 = vmatmul.mubr.f32.gmra.mxu0 %v146
    %v622 = vpop.f32.mrf.mxu0
    %v623 = vadd.f32 %v508, %v622
    %v624 = vpop.f32.mrf.mxu0
    %v625 = vadd.f32 %v512, %v624
    %626 = vmatprep.mubr.f32.mxu0 0.0
    %627 = vmatmul.mubr.f32.gmra.mxu0 %v147
    %v628 = vpop.f32.mrf.mxu0
    %v629 = vadd.f32 %v508, %v628
    %v630 = vpop.f32.mrf.mxu0
    %v631 = vadd.f32 %v512, %v630
    %632 = vdwg.mxu0
    %633 = vmatprep.subr.mxu0 0.0
    %634 = vmatpush1.msra.mxu0 %v502
    %635 = vmatprep.subr.mxu0 0.0
    %636 = vmatpush1.msra.mxu0 %v499
    %637 = vmatprep.subr.mxu0 0.0
    %638 = vmatpush1.msra.mxu0 %v496
    %639 = vmatprep.subr.mxu0 0.0
    %640 = vmatpush1.msra.mxu0 %v493
    %641 = vmatprep.subr.mxu0 0.0
    %642 = vmatpush1.msra.mxu0 %v490
    %643 = vmatprep.subr.mxu0 0.0
    %644 = vmatpush1.msra.mxu0 %v487
    %645 = vmatprep.subr.mxu0 0.0
    %646 = vmatpush1.msra.mxu0 %v484
    %647 = vmatprep.subr.mxu0 0.0
    %648 = vmatpush1.msra.mxu0 %v481
    %649 = vmatprep.subr.mxu0 0.0
    %650 = vmatpush1.msra.mxu0 %v478
    %651 = vmatprep.subr.mxu0 0.0
    %652 = vmatpush1.msra.mxu0 %v475
    %653 = vmatprep.subr.mxu0 0.0
    %654 = vmatpush1.msra.mxu0 %v472
    %655 = vmatprep.subr.mxu0 0.0
    %656 = vmatpush1.msra.mxu0 %v469
    %657 = vmatprep.subr.mxu0 0.0
    %658 = vmatpush1.msra.mxu0 %v466
    %659 = vmatprep.subr.mxu0 0.0
    %660 = vmatpush1.msra.mxu0 %v463
    %661 = vmatprep.subr.mxu0 0.0
    %662 = vmatpush1.msra.mxu0 %v460
    %663 = vmatprep.subr.mxu0 0.0
    %664 = vmatpush1.msra.mxu0 %v457
    %665 = vmatprep.subr.mxu0 0.0
    %666 = vmatpush2.msra.mxu0 0.0
    %667 = vmatprep.subr.mxu0 0.0
    %668 = vmatpush2.msra.mxu0 0.0
    %669 = vmatprep.subr.mxu0 0.0
    %670 = vmatpush2.msra.mxu0 0.0
    %671 = vmatprep.subr.mxu0 0.0
    %672 = vmatpush2.msra.mxu0 0.0
    %673 = vmatprep.subr.mxu0 0.0
    %674 = vmatpush2.msra.mxu0 0.0
    %675 = vmatprep.subr.mxu0 0.0
    %676 = vmatpush2.msra.mxu0 0.0
    %677 = vmatprep.subr.mxu0 0.0
    %678 = vmatpush2.msra.mxu0 0.0
    %679 = vmatprep.subr.mxu0 0.0
    %680 = vmatpush2.msra.mxu0 0.0
    %681 = vmatprep.subr.mxu0 0.0
    %682 = vmatpush2.msra.mxu0 0.0
    %683 = vmatprep.subr.mxu0 0.0
    %684 = vmatpush2.msra.mxu0 0.0
    %685 = vmatprep.subr.mxu0 0.0
    %686 = vmatpush2.msra.mxu0 0.0
    %687 = vmatprep.subr.mxu0 0.0
    %688 = vmatpush2.msra.mxu0 0.0
    %689 = vmatprep.subr.mxu0 0.0
    %690 = vmatpush2.msra.mxu0 0.0
    %691 = vmatprep.subr.mxu0 0.0
    %692 = vmatpush2.msra.mxu0 0.0
    %693 = vmatprep.subr.mxu0 0.0
    %694 = vmatpush2.msra.mxu0 0.0
    %695 = vmatprep.subr.mxu0 0.0
    %696 = vmatpush2.msra.mxu0 0.0
    %697 = vmatprep.mubr.f32.mxu0 0.0
    %698 = vmatmul.mubr.f32.gmra.mxu0 %v140
    %v699 = vpop.f32.mrf.mxu0
    %v700 = vadd.f32 %v516, %v699
    %v701 = vpop.f32.mrf.mxu0
    %702 = vmatprep.mubr.f32.mxu0 0.0
    %703 = vmatmul.mubr.f32.gmra.mxu0 %v141
    %v704 = vpop.f32.mrf.mxu0
    %v705 = vadd.f32 %v516, %v704
    %v706 = vpop.f32.mrf.mxu0
    %707 = vmatprep.mubr.f32.mxu0 0.0
    %708 = vmatmul.mubr.f32.gmra.mxu0 %v142
    %v709 = vpop.f32.mrf.mxu0
    %v710 = vadd.f32 %v516, %v709
    %v711 = vpop.f32.mrf.mxu0
    %712 = vmatprep.mubr.f32.mxu0 0.0
    %713 = vmatmul.mubr.f32.gmra.mxu0 %v143
    %v714 = vpop.f32.mrf.mxu0
    %v715 = vadd.f32 %v516, %v714
    %v716 = vpop.f32.mrf.mxu0
    %717 = vmatprep.mubr.f32.mxu0 0.0
    %718 = vmatmul.mubr.f32.gmra.mxu0 %v144
    %v719 = vpop.f32.mrf.mxu0
    %v720 = vadd.f32 %v516, %v719
    %v721 = vpop.f32.mrf.mxu0
    %722 = vmatprep.mubr.f32.mxu0 0.0
    %723 = vmatmul.mubr.f32.gmra.mxu0 %v145
    %v724 = vpop.f32.mrf.mxu0
    %v725 = vadd.f32 %v516, %v724
    %v726 = vpop.f32.mrf.mxu0
    %727 = vmatprep.mubr.f32.mxu0 0.0
    %728 = vmatmul.mubr.f32.gmra.mxu0 %v146
    %v729 = vpop.f32.mrf.mxu0
    %v730 = vadd.f32 %v516, %v729
    %v731 = vpop.f32.mrf.mxu0
    %732 = vmatprep.mubr.f32.mxu0 0.0
    %733 = vmatmul.mubr.f32.gmra.mxu0 %v147
    %v734 = vpop.f32.mrf.mxu0
    %v735 = vadd.f32 %v516, %v734
    %v736 = vpop.f32.mrf.mxu0
    %737 = vdwg.mxu0
    %738 = vst [vmem:[#allocation3] sm:$0xff] %v587
    %739 = vst [vmem:[#allocation3 + $0x8] sm:$0xff] %v589
    %740 = vst [vmem:[#allocation3 + $0x10] sm:$0xff] %v700
    %741 = vst [vmem:[#allocation3 + $0x18] sm:$0xff] %v593
    %742 = vst [vmem:[#allocation3 + $0x20] sm:$0xff] %v595
    %743 = vst [vmem:[#allocation3 + $0x28] sm:$0xff] %v705
    %744 = vst [vmem:[#allocation3 + $0x30] sm:$0xff] %v599
    %745 = vst [vmem:[#allocation3 + $0x38] sm:$0xff] %v601
    %746 = vst [vmem:[#allocation3 + $0x40] sm:$0xff] %v710
    %747 = vst [vmem:[#allocation3 + $0x48] sm:$0xff] %v605
    %748 = vst [vmem:[#allocation3 + $0x50] sm:$0xff] %v607
    %749 = vst [vmem:[#allocation3 + $0x58] sm:$0xff] %v715
    %750 = vst [vmem:[#allocation3 + $0x60] sm:$0xff] %v611
    %751 = vst [vmem:[#allocation3 + $0x68] sm:$0xff] %v613
    %752 = vst [vmem:[#allocation3 + $0x70] sm:$0xff] %v720
    %753 = vst [vmem:[#allocation3 + $0x78] sm:$0xff] %v617
    %754 = vst [vmem:[#allocation3 + $0x80] sm:$0xff] %v619
    %755 = vst [vmem:[#allocation3 + $0x88] sm:$0xff] %v725
    %756 = vst [vmem:[#allocation3 + $0x90] sm:$0xff] %v623
    %757 = vst [vmem:[#allocation3 + $0x98] sm:$0xff] %v625
    %758 = vst [vmem:[#allocation3 + $0xa0] sm:$0xff] %v730
    %759 = vst [vmem:[#allocation3 + $0xa8] sm:$0xff] %v629
    %760 = vst [vmem:[#allocation3 + $0xb0] sm:$0xff] %v631
    %761 = vst [vmem:[#allocation3 + $0xb8] sm:$0xff] %v735
    loop: start=0, step=1, limit=8
    $region78: #{tpu_custom_call.1} parent=1 // loop_pre_header
      _
    $region79: #{tpu_custom_call.1} parent=1 // loop_header
      %s763 = sphi 0, %s767
      %p764 = scmp.ge.s32.totalorder %s763, 8
      %v768 = vphi 0.0, %v1001
    $region80: #{tpu_custom_call.1} parent=1 // loop_header_branch
      %766 = sbr.rel (%p764) target = $region84
    $region81: #{tpu_custom_call.1} parent=1 // loop_body
      %s769 = smul.u32 %s763, 3
      %s770 = smul.addr %s769, 8
      %s771 = scalar_lea.vmem [#allocation2], %s770
      %v772 = vld [vmem:[%s771] sm:$0xff]
      %v773 = vld [vmem:[%s771 + $0x8] sm:$0xff]
      %v774 = vld [vmem:[%s771 + $0x10] sm:$0xff]
      %v775 = vld [vmem:[#allocation10] sm:$0xff]
      %v776 = vld [vmem:[#allocation10 + $0x8] sm:$0xff]
      %v777 = vld [vmem:[#allocation10 + $0x10] sm:$0xff]
      %v778 = vld [vmem:[#allocation10 + $0x18] sm:$0xff]
      %v779 = vld [vmem:[#allocation10 + $0x20] sm:$0xff]
      %v780 = vld [vmem:[#allocation10 + $0x28] sm:$0xff]
      %v781 = vld [vmem:[#allocation10 + $0x30] sm:$0xff]
      %v782 = vld [vmem:[#allocation10 + $0x38] sm:$0xff]
      %v783 = vld [vmem:[#allocation10 + $0x40] sm:$0xff]
      %v784 = vld [vmem:[#allocation10 + $0x48] sm:$0xff]
      %v785 = vld [vmem:[#allocation10 + $0x50] sm:$0xff]
      %v786 = vld [vmem:[#allocation10 + $0x58] sm:$0xff]
      %v787 = vld [vmem:[#allocation10 + $0x60] sm:$0xff]
      %v788 = vld [vmem:[#allocation10 + $0x68] sm:$0xff]
      %v789 = vld [vmem:[#allocation10 + $0x70] sm:$0xff]
      %v790 = vld [vmem:[#allocation10 + $0x78] sm:$0xff]
      %v791 = vld [vmem:[#allocation10 + $0x80] sm:$0xff]
      %v792 = vld [vmem:[#allocation10 + $0x88] sm:$0xff]
      %v793 = vld [vmem:[#allocation10 + $0x90] sm:$0xff]
      %v794 = vld [vmem:[#allocation10 + $0x98] sm:$0xff]
      %v795 = vld [vmem:[#allocation10 + $0xa0] sm:$0xff]
      %v796 = vld [vmem:[#allocation10 + $0xa8] sm:$0xff]
      %v797 = vld [vmem:[#allocation10 + $0xb0] sm:$0xff]
      %v798 = vld [vmem:[#allocation10 + $0xb8] sm:$0xff]
      %v799 = vld [vmem:[#allocation10 + $0xc0] sm:$0xff]
      %v800 = vld [vmem:[#allocation10 + $0xc8] sm:$0xff]
      %v801 = vld [vmem:[#allocation10 + $0xd0] sm:$0xff]
      %v802 = vld [vmem:[#allocation10 + $0xd8] sm:$0xff]
      %v803 = vld [vmem:[#allocation10 + $0xe0] sm:$0xff]
      %v804 = vld [vmem:[#allocation10 + $0xe8] sm:$0xff]
      %v805 = vld [vmem:[#allocation10 + $0xf0] sm:$0xff]
      %v806 = vld [vmem:[#allocation10 + $0xf8] sm:$0xff]
      %v807 = vld [vmem:[#allocation10 + $0x100] sm:$0xff]
      %v808 = vld [vmem:[#allocation10 + $0x108] sm:$0xff]
      %v809 = vld [vmem:[#allocation10 + $0x110] sm:$0xff]
      %v810 = vld [vmem:[#allocation10 + $0x118] sm:$0xff]
      %v811 = vld [vmem:[#allocation10 + $0x120] sm:$0xff]
      %v812 = vld [vmem:[#allocation10 + $0x128] sm:$0xff]
      %v813 = vld [vmem:[#allocation10 + $0x130] sm:$0xff]
      %v814 = vld [vmem:[#allocation10 + $0x138] sm:$0xff]
      %v815 = vld [vmem:[#allocation10 + $0x140] sm:$0xff]
      %v816 = vld [vmem:[#allocation10 + $0x148] sm:$0xff]
      %v817 = vld [vmem:[#allocation10 + $0x150] sm:$0xff]
      %v818 = vld [vmem:[#allocation10 + $0x158] sm:$0xff]
      %v819 = vld [vmem:[#allocation10 + $0x160] sm:$0xff]
      %v820 = vld [vmem:[#allocation10 + $0x168] sm:$0xff]
      %v821 = vld [vmem:[#allocation10 + $0x170] sm:$0xff]
      %v822 = vld [vmem:[#allocation10 + $0x178] sm:$0xff]
      %v823 = vld [vmem:[%s4] sm:$0x7]
      %v825 = vlaneseq
      %v826 = vshrl.u32 %v825, 7
      %v827 = vsub.s32 0, %v826
      %v828 = vrot.slane %v823, %v827
      %v829 = vlaneseq
      %v830 = vshrl.u32 %v829, 7
      %v831 = vsub.s32 1, %v830
      %v832 = vrot.slane %v823, %v831
      %v833 = vlaneseq
      %v834 = vshrl.u32 %v833, 7
      %v835 = vsub.s32 2, %v834
      %v836 = vrot.slane %v823, %v835
      %840 = vmatprep.subr.mxu0 %v821
      %841 = vmatpush1.msra.mxu0 %v820
      %842 = vmatprep.subr.mxu0 %v818
      %843 = vmatpush1.msra.mxu0 %v817
      %844 = vmatprep.subr.mxu0 %v815
      %845 = vmatpush1.msra.mxu0 %v814
      %846 = vmatprep.subr.mxu0 %v812
      %847 = vmatpush1.msra.mxu0 %v811
      %848 = vmatprep.subr.mxu0 %v809
      %849 = vmatpush1.msra.mxu0 %v808
      %850 = vmatprep.subr.mxu0 %v806
      %851 = vmatpush1.msra.mxu0 %v805
      %852 = vmatprep.subr.mxu0 %v803
      %853 = vmatpush1.msra.mxu0 %v802
      %854 = vmatprep.subr.mxu0 %v800
      %855 = vmatpush1.msra.mxu0 %v799
      %856 = vmatprep.subr.mxu0 %v797
      %857 = vmatpush1.msra.mxu0 %v796
      %858 = vmatprep.subr.mxu0 %v794
      %859 = vmatpush1.msra.mxu0 %v793
      %860 = vmatprep.subr.mxu0 %v791
      %861 = vmatpush1.msra.mxu0 %v790
      %862 = vmatprep.subr.mxu0 %v788
      %863 = vmatpush1.msra.mxu0 %v787
      %864 = vmatprep.subr.mxu0 %v785
      %865 = vmatpush1.msra.mxu0 %v784
      %866 = vmatprep.subr.mxu0 %v782
      %867 = vmatpush1.msra.mxu0 %v781
      %868 = vmatprep.subr.mxu0 %v779
      %869 = vmatpush1.msra.mxu0 %v778
      %870 = vmatprep.subr.mxu0 %v776
      %871 = vmatpush1.msra.mxu0 %v775
      %872 = vmatprep.subr.mxu0 0.0
      %873 = vmatpush2.msra.mxu0 0.0
      %874 = vmatprep.subr.mxu0 0.0
      %875 = vmatpush2.msra.mxu0 0.0
      %876 = vmatprep.subr.mxu0 0.0
      %877 = vmatpush2.msra.mxu0 0.0
      %878 = vmatprep.subr.mxu0 0.0
      %879 = vmatpush2.msra.mxu0 0.0
      %880 = vmatprep.subr.mxu0 0.0
      %881 = vmatpush2.msra.mxu0 0.0
      %882 = vmatprep.subr.mxu0 0.0
      %883 = vmatpush2.msra.mxu0 0.0
      %884 = vmatprep.subr.mxu0 0.0
      %885 = vmatpush2.msra.mxu0 0.0
      %886 = vmatprep.subr.mxu0 0.0
      %887 = vmatpush2.msra.mxu0 0.0
      %888 = vmatprep.subr.mxu0 0.0
      %889 = vmatpush2.msra.mxu0 0.0
      %890 = vmatprep.subr.mxu0 0.0
      %891 = vmatpush2.msra.mxu0 0.0
      %892 = vmatprep.subr.mxu0 0.0
      %893 = vmatpush2.msra.mxu0 0.0
      %894 = vmatprep.subr.mxu0 0.0
      %895 = vmatpush2.msra.mxu0 0.0
      %896 = vmatprep.subr.mxu0 0.0
      %897 = vmatpush2.msra.mxu0 0.0
      %898 = vmatprep.subr.mxu0 0.0
      %899 = vmatpush2.msra.mxu0 0.0
      %900 = vmatprep.subr.mxu0 0.0
      %901 = vmatpush2.msra.mxu0 0.0
      %902 = vmatprep.subr.mxu0 0.0
      %903 = vmatpush2.msra.mxu0 0.0
      %904 = vmatprep.mubr.f32.mxu0 0.0
      %905 = vmatmul.mubr.f32.gmra.mxu0 %v768
      %v906 = vpop.f32.mrf.mxu0
      %v907 = vadd.f32 %v828, %v906
      %v908 = vpop.f32.mrf.mxu0
      %v909 = vadd.f32 %v832, %v908
      %910 = vdwg.mxu0
      %911 = vmatprep.subr.mxu0 0.0
      %912 = vmatpush1.msra.mxu0 %v822
      %913 = vmatprep.subr.mxu0 0.0
      %914 = vmatpush1.msra.mxu0 %v819
      %915 = vmatprep.subr.mxu0 0.0
      %916 = vmatpush1.msra.mxu0 %v816
      %917 = vmatprep.subr.mxu0 0.0
      %918 = vmatpush1.msra.mxu0 %v813
      %919 = vmatprep.subr.mxu0 0.0
      %920 = vmatpush1.msra.mxu0 %v810
      %921 = vmatprep.subr.mxu0 0.0
      %922 = vmatpush1.msra.mxu0 %v807
      %923 = vmatprep.subr.mxu0 0.0
      %924 = vmatpush1.msra.mxu0 %v804
      %925 = vmatprep.subr.mxu0 0.0
      %926 = vmatpush1.msra.mxu0 %v801
      %927 = vmatprep.subr.mxu0 0.0
      %928 = vmatpush1.msra.mxu0 %v798
      %929 = vmatprep.subr.mxu0 0.0
      %930 = vmatpush1.msra.mxu0 %v795
      %931 = vmatprep.subr.mxu0 0.0
      %932 = vmatpush1.msra.mxu0 %v792
      %933 = vmatprep.subr.mxu0 0.0
      %934 = vmatpush1.msra.mxu0 %v789
      %935 = vmatprep.subr.mxu0 0.0
      %936 = vmatpush1.msra.mxu0 %v786
      %937 = vmatprep.subr.mxu0 0.0
      %938 = vmatpush1.msra.mxu0 %v783
      %939 = vmatprep.subr.mxu0 0.0
      %940 = vmatpush1.msra.mxu0 %v780
      %941 = vmatprep.subr.mxu0 0.0
      %942 = vmatpush1.msra.mxu0 %v777
      %943 = vmatprep.subr.mxu0 0.0
      %944 = vmatpush2.msra.mxu0 0.0
      %945 = vmatprep.subr.mxu0 0.0
      %946 = vmatpush2.msra.mxu0 0.0
      %947 = vmatprep.subr.mxu0 0.0
      %948 = vmatpush2.msra.mxu0 0.0
      %949 = vmatprep.subr.mxu0 0.0
      %950 = vmatpush2.msra.mxu0 0.0
      %951 = vmatprep.subr.mxu0 0.0
      %952 = vmatpush2.msra.mxu0 0.0
      %953 = vmatprep.subr.mxu0 0.0
      %954 = vmatpush2.msra.mxu0 0.0
      %955 = vmatprep.subr.mxu0 0.0
      %956 = vmatpush2.msra.mxu0 0.0
      %957 = vmatprep.subr.mxu0 0.0
      %958 = vmatpush2.msra.mxu0 0.0
      %959 = vmatprep.subr.mxu0 0.0
      %960 = vmatpush2.msra.mxu0 0.0
      %961 = vmatprep.subr.mxu0 0.0
      %962 = vmatpush2.msra.mxu0 0.0
      %963 = vmatprep.subr.mxu0 0.0
      %964 = vmatpush2.msra.mxu0 0.0
      %965 = vmatprep.subr.mxu0 0.0
      %966 = vmatpush2.msra.mxu0 0.0
      %967 = vmatprep.subr.mxu0 0.0
      %968 = vmatpush2.msra.mxu0 0.0
      %969 = vmatprep.subr.mxu0 0.0
      %970 = vmatpush2.msra.mxu0 0.0
      %971 = vmatprep.subr.mxu0 0.0
      %972 = vmatpush2.msra.mxu0 0.0
      %973 = vmatprep.subr.mxu0 0.0
      %974 = vmatpush2.msra.mxu0 0.0
      %975 = vmatprep.mubr.f32.mxu0 0.0
      %976 = vmatmul.mubr.f32.gmra.mxu0 %v768
      %v977 = vpop.f32.mrf.mxu0
      %v978 = vadd.f32 %v836, %v977
      %v979 = vpop.f32.mrf.mxu0
      %980 = vdwg.mxu0
      %v981 = vadd.f32 %v772, %v907
      %v982 = vxor.u32 %v981, 2147483648
      %v983 = vmul.f32 %v982, 1.442695
      %v984 = vpow.pop %v983
      %v985 = vadd.f32 %v984, 1.0
      %v986 = vrcp.pop %v985
      %v987 = vmul.f32 1.0, %v986
      %v988 = vadd.f32 %v773, %v909
      %v989 = vxor.u32 %v988, 2147483648
      %v990 = vmul.f32 %v989, 1.442695
      %v991 = vpow.pop %v990
      %v992 = vadd.f32 %v991, 1.0
      %v993 = vrcp.pop %v992
      %v994 = vmul.f32 1.0, %v993
      %v995 = vmul.f32 %v987, %v978
      %v996 = vadd.f32 %v774, %v995
      %v997 = vtanh.pop %v996
      %v998 = vsub.f32 1.0, %v994
      %v999 = vmul.f32 %v998, %v997
      %v1000 = vmul.f32 %v994, %v768
      %v1001 = vadd.f32 %v999, %v1000
      %s1002 = smul.u32 %s763, 8
      %s1003 = scalar_lea.vmem [#allocation4], %s1002
      %1004 = vst [vmem:[%s1003] sm:$0xff] %v1001
    $region82: #{tpu_custom_call.1} parent=1 // loop_footer
      %s767 = sadd.s32 1, %s763
    $region83: #{tpu_custom_call.1} parent=1 // loop_footer_branch
      %762 = sbr.rel target = $region79
    $region84: #{tpu_custom_call.1} parent=1 // loop_exit
      _
    loop: start=0, step=1, limit=8
    $region85: #{tpu_custom_call.1} parent=1 // loop_pre_header
      _
    $region86: #{tpu_custom_call.1} parent=1 // loop_header
      %s1006 = sphi 0, %s1010
      %p1007 = scmp.ge.s32.totalorder %s1006, 8
      %v1011 = vphi 0.0, %v1245
    $region87: #{tpu_custom_call.1} parent=1 // loop_header_branch
      %1009 = sbr.rel (%p1007) target = $region91
    $region88: #{tpu_custom_call.1} parent=1 // loop_body
      %s1012 = ssub.s32 7, %s1006
      %s1013 = smul.u32 %s1012, 3
      %s1014 = smul.addr %s1013, 8
      %s1015 = scalar_lea.vmem [#allocation3], %s1014
      %v1016 = vld [vmem:[%s1015] sm:$0xff]
      %v1017 = vld [vmem:[%s1015 + $0x8] sm:$0xff]
      %v1018 = vld [vmem:[%s1015 + $0x10] sm:$0xff]
      %v1019 = vld [vmem:[#allocation13] sm:$0xff]
      %v1020 = vld [vmem:[#allocation13 + $0x8] sm:$0xff]
      %v1021 = vld [vmem:[#allocation13 + $0x10] sm:$0xff]
      %v1022 = vld [vmem:[#allocation13 + $0x18] sm:$0xff]
      %v1023 = vld [vmem:[#allocation13 + $0x20] sm:$0xff]
      %v1024 = vld [vmem:[#allocation13 + $0x28] sm:$0xff]
      %v1025 = vld [vmem:[#allocation13 + $0x30] sm:$0xff]
      %v1026 = vld [vmem:[#allocation13 + $0x38] sm:$0xff]
      %v1027 = vld [vmem:[#allocation13 + $0x40] sm:$0xff]
      %v1028 = vld [vmem:[#allocation13 + $0x48] sm:$0xff]
      %v1029 = vld [vmem:[#allocation13 + $0x50] sm:$0xff]
      %v1030 = vld [vmem:[#allocation13 + $0x58] sm:$0xff]
      %v1031 = vld [vmem:[#allocation13 + $0x60] sm:$0xff]
      %v1032 = vld [vmem:[#allocation13 + $0x68] sm:$0xff]
      %v1033 = vld [vmem:[#allocation13 + $0x70] sm:$0xff]
      %v1034 = vld [vmem:[#allocation13 + $0x78] sm:$0xff]
      %v1035 = vld [vmem:[#allocation13 + $0x80] sm:$0xff]
      %v1036 = vld [vmem:[#allocation13 + $0x88] sm:$0xff]
      %v1037 = vld [vmem:[#allocation13 + $0x90] sm:$0xff]
      %v1038 = vld [vmem:[#allocation13 + $0x98] sm:$0xff]
      %v1039 = vld [vmem:[#allocation13 + $0xa0] sm:$0xff]
      %v1040 = vld [vmem:[#allocation13 + $0xa8] sm:$0xff]
      %v1041 = vld [vmem:[#allocation13 + $0xb0] sm:$0xff]
      %v1042 = vld [vmem:[#allocation13 + $0xb8] sm:$0xff]
      %v1043 = vld [vmem:[#allocation13 + $0xc0] sm:$0xff]
      %v1044 = vld [vmem:[#allocation13 + $0xc8] sm:$0xff]
      %v1045 = vld [vmem:[#allocation13 + $0xd0] sm:$0xff]
      %v1046 = vld [vmem:[#allocation13 + $0xd8] sm:$0xff]
      %v1047 = vld [vmem:[#allocation13 + $0xe0] sm:$0xff]
      %v1048 = vld [vmem:[#allocation13 + $0xe8] sm:$0xff]
      %v1049 = vld [vmem:[#allocation13 + $0xf0] sm:$0xff]
      %v1050 = vld [vmem:[#allocation13 + $0xf8] sm:$0xff]
      %v1051 = vld [vmem:[#allocation13 + $0x100] sm:$0xff]
      %v1052 = vld [vmem:[#allocation13 + $0x108] sm:$0xff]
      %v1053 = vld [vmem:[#allocation13 + $0x110] sm:$0xff]
      %v1054 = vld [vmem:[#allocation13 + $0x118] sm:$0xff]
      %v1055 = vld [vmem:[#allocation13 + $0x120] sm:$0xff]
      %v1056 = vld [vmem:[#allocation13 + $0x128] sm:$0xff]
      %v1057 = vld [vmem:[#allocation13 + $0x130] sm:$0xff]
      %v1058 = vld [vmem:[#allocation13 + $0x138] sm:$0xff]
      %v1059 = vld [vmem:[#allocation13 + $0x140] sm:$0xff]
      %v1060 = vld [vmem:[#allocation13 + $0x148] sm:$0xff]
      %v1061 = vld [vmem:[#allocation13 + $0x150] sm:$0xff]
      %v1062 = vld [vmem:[#allocation13 + $0x158] sm:$0xff]
      %v1063 = vld [vmem:[#allocation13 + $0x160] sm:$0xff]
      %v1064 = vld [vmem:[#allocation13 + $0x168] sm:$0xff]
      %v1065 = vld [vmem:[#allocation13 + $0x170] sm:$0xff]
      %v1066 = vld [vmem:[#allocation13 + $0x178] sm:$0xff]
      %v1067 = vld [vmem:[%s8] sm:$0x7]
      %v1069 = vlaneseq
      %v1070 = vshrl.u32 %v1069, 7
      %v1071 = vsub.s32 0, %v1070
      %v1072 = vrot.slane %v1067, %v1071
      %v1073 = vlaneseq
      %v1074 = vshrl.u32 %v1073, 7
      %v1075 = vsub.s32 1, %v1074
      %v1076 = vrot.slane %v1067, %v1075
      %v1077 = vlaneseq
      %v1078 = vshrl.u32 %v1077, 7
      %v1079 = vsub.s32 2, %v1078
      %v1080 = vrot.slane %v1067, %v1079
      %1084 = vmatprep.subr.mxu0 %v1065
      %1085 = vmatpush1.msra.mxu0 %v1064
      %1086 = vmatprep.subr.mxu0 %v1062
      %1087 = vmatpush1.msra.mxu0 %v1061
      %1088 = vmatprep.subr.mxu0 %v1059
      %1089 = vmatpush1.msra.mxu0 %v1058
      %1090 = vmatprep.subr.mxu0 %v1056
      %1091 = vmatpush1.msra.mxu0 %v1055
      %1092 = vmatprep.subr.mxu0 %v1053
      %1093 = vmatpush1.msra.mxu0 %v1052
      %1094 = vmatprep.subr.mxu0 %v1050
      %1095 = vmatpush1.msra.mxu0 %v1049
      %1096 = vmatprep.subr.mxu0 %v1047
      %1097 = vmatpush1.msra.mxu0 %v1046
      %1098 = vmatprep.subr.mxu0 %v1044
      %1099 = vmatpush1.msra.mxu0 %v1043
      %1100 = vmatprep.subr.mxu0 %v1041
      %1101 = vmatpush1.msra.mxu0 %v1040
      %1102 = vmatprep.subr.mxu0 %v1038
      %1103 = vmatpush1.msra.mxu0 %v1037
      %1104 = vmatprep.subr.mxu0 %v1035
      %1105 = vmatpush1.msra.mxu0 %v1034
      %1106 = vmatprep.subr.mxu0 %v1032
      %1107 = vmatpush1.msra.mxu0 %v1031
      %1108 = vmatprep.subr.mxu0 %v1029
      %1109 = vmatpush1.msra.mxu0 %v1028
      %1110 = vmatprep.subr.mxu0 %v1026
      %1111 = vmatpush1.msra.mxu0 %v1025
      %1112 = vmatprep.subr.mxu0 %v1023
      %1113 = vmatpush1.msra.mxu0 %v1022
      %1114 = vmatprep.subr.mxu0 %v1020
      %1115 = vmatpush1.msra.mxu0 %v1019
      %1116 = vmatprep.subr.mxu0 0.0
      %1117 = vmatpush2.msra.mxu0 0.0
      %1118 = vmatprep.subr.mxu0 0.0
      %1119 = vmatpush2.msra.mxu0 0.0
      %1120 = vmatprep.subr.mxu0 0.0
      %1121 = vmatpush2.msra.mxu0 0.0
      %1122 = vmatprep.subr.mxu0 0.0
      %1123 = vmatpush2.msra.mxu0 0.0
      %1124 = vmatprep.subr.mxu0 0.0
      %1125 = vmatpush2.msra.mxu0 0.0
      %1126 = vmatprep.subr.mxu0 0.0
      %1127 = vmatpush2.msra.mxu0 0.0
      %1128 = vmatprep.subr.mxu0 0.0
      %1129 = vmatpush2.msra.mxu0 0.0
      %1130 = vmatprep.subr.mxu0 0.0
      %1131 = vmatpush2.msra.mxu0 0.0
      %1132 = vmatprep.subr.mxu0 0.0
      %1133 = vmatpush2.msra.mxu0 0.0
      %1134 = vmatprep.subr.mxu0 0.0
      %1135 = vmatpush2.msra.mxu0 0.0
      %1136 = vmatprep.subr.mxu0 0.0
      %1137 = vmatpush2.msra.mxu0 0.0
      %1138 = vmatprep.subr.mxu0 0.0
      %1139 = vmatpush2.msra.mxu0 0.0
      %1140 = vmatprep.subr.mxu0 0.0
      %1141 = vmatpush2.msra.mxu0 0.0
      %1142 = vmatprep.subr.mxu0 0.0
      %1143 = vmatpush2.msra.mxu0 0.0
      %1144 = vmatprep.subr.mxu0 0.0
      %1145 = vmatpush2.msra.mxu0 0.0
      %1146 = vmatprep.subr.mxu0 0.0
      %1147 = vmatpush2.msra.mxu0 0.0
      %1148 = vmatprep.mubr.f32.mxu0 0.0
      %1149 = vmatmul.mubr.f32.gmra.mxu0 %v1011
      %v1150 = vpop.f32.mrf.mxu0
      %v1151 = vadd.f32 %v1072, %v1150
      %v1152 = vpop.f32.mrf.mxu0
      %v1153 = vadd.f32 %v1076, %v1152
      %1154 = vdwg.mxu0
      %1155 = vmatprep.subr.mxu0 0.0
      %1156 = vmatpush1.msra.mxu0 %v1066
      %1157 = vmatprep.subr.mxu0 0.0
      %1158 = vmatpush1.msra.mxu0 %v1063
      %1159 = vmatprep.subr.mxu0 0.0
      %1160 = vmatpush1.msra.mxu0 %v1060
      %1161 = vmatprep.subr.mxu0 0.0
      %1162 = vmatpush1.msra.mxu0 %v1057
      %1163 = vmatprep.subr.mxu0 0.0
      %1164 = vmatpush1.msra.mxu0 %v1054
      %1165 = vmatprep.subr.mxu0 0.0
      %1166 = vmatpush1.msra.mxu0 %v1051
      %1167 = vmatprep.subr.mxu0 0.0
      %1168 = vmatpush1.msra.mxu0 %v1048
      %1169 = vmatprep.subr.mxu0 0.0
      %1170 = vmatpush1.msra.mxu0 %v1045
      %1171 = vmatprep.subr.mxu0 0.0
      %1172 = vmatpush1.msra.mxu0 %v1042
      %1173 = vmatprep.subr.mxu0 0.0
      %1174 = vmatpush1.msra.mxu0 %v1039
      %1175 = vmatprep.subr.mxu0 0.0
      %1176 = vmatpush1.msra.mxu0 %v1036
      %1177 = vmatprep.subr.mxu0 0.0
      %1178 = vmatpush1.msra.mxu0 %v1033
      %1179 = vmatprep.subr.mxu0 0.0
      %1180 = vmatpush1.msra.mxu0 %v1030
      %1181 = vmatprep.subr.mxu0 0.0
      %1182 = vmatpush1.msra.mxu0 %v1027
      %1183 = vmatprep.subr.mxu0 0.0
      %1184 = vmatpush1.msra.mxu0 %v1024
      %1185 = vmatprep.subr.mxu0 0.0
      %1186 = vmatpush1.msra.mxu0 %v1021
      %1187 = vmatprep.subr.mxu0 0.0
      %1188 = vmatpush2.msra.mxu0 0.0
      %1189 = vmatprep.subr.mxu0 0.0
      %1190 = vmatpush2.msra.mxu0 0.0
      %1191 = vmatprep.subr.mxu0 0.0
      %1192 = vmatpush2.msra.mxu0 0.0
      %1193 = vmatprep.subr.mxu0 0.0
      %1194 = vmatpush2.msra.mxu0 0.0
      %1195 = vmatprep.subr.mxu0 0.0
      %1196 = vmatpush2.msra.mxu0 0.0
      %1197 = vmatprep.subr.mxu0 0.0
      %1198 = vmatpush2.msra.mxu0 0.0
      %1199 = vmatprep.subr.mxu0 0.0
      %1200 = vmatpush2.msra.mxu0 0.0
      %1201 = vmatprep.subr.mxu0 0.0
      %1202 = vmatpush2.msra.mxu0 0.0
      %1203 = vmatprep.subr.mxu0 0.0
      %1204 = vmatpush2.msra.mxu0 0.0
      %1205 = vmatprep.subr.mxu0 0.0
      %1206 = vmatpush2.msra.mxu0 0.0
      %1207 = vmatprep.subr.mxu0 0.0
      %1208 = vmatpush2.msra.mxu0 0.0
      %1209 = vmatprep.subr.mxu0 0.0
      %1210 = vmatpush2.msra.mxu0 0.0
      %1211 = vmatprep.subr.mxu0 0.0
      %1212 = vmatpush2.msra.mxu0 0.0
      %1213 = vmatprep.subr.mxu0 0.0
      %1214 = vmatpush2.msra.mxu0 0.0
      %1215 = vmatprep.subr.mxu0 0.0
      %1216 = vmatpush2.msra.mxu0 0.0
      %1217 = vmatprep.subr.mxu0 0.0
      %1218 = vmatpush2.msra.mxu0 0.0
      %1219 = vmatprep.mubr.f32.mxu0 0.0
      %1220 = vmatmul.mubr.f32.gmra.mxu0 %v1011
      %v1221 = vpop.f32.mrf.mxu0
      %v1222 = vadd.f32 %v1080, %v1221
      %v1223 = vpop.f32.mrf.mxu0
      %1224 = vdwg.mxu0
      %v1225 = vadd.f32 %v1016, %v1151
      %v1226 = vxor.u32 %v1225, 2147483648
      %v1227 = vmul.f32 %v1226, 1.442695
      %v1228 = vpow.pop %v1227
      %v1229 = vadd.f32 %v1228, 1.0
      %v1230 = vrcp.pop %v1229
      %v1231 = vmul.f32 1.0, %v1230
      %v1232 = vadd.f32 %v1017, %v1153
      %v1233 = vxor.u32 %v1232, 2147483648
      %v1234 = vmul.f32 %v1233, 1.442695
      %v1235 = vpow.pop %v1234
      %v1236 = vadd.f32 %v1235, 1.0
      %v1237 = vrcp.pop %v1236
      %v1238 = vmul.f32 1.0, %v1237
      %v1239 = vmul.f32 %v1231, %v1222
      %v1240 = vadd.f32 %v1018, %v1239
      %v1241 = vtanh.pop %v1240
      %v1242 = vsub.f32 1.0, %v1238
      %v1243 = vmul.f32 %v1242, %v1241
      %v1244 = vmul.f32 %v1238, %v1011
      %v1245 = vadd.f32 %v1243, %v1244
      %s1246 = smul.u32 %s1012, 8
      %s1247 = scalar_lea.vmem [#allocation4], %s1246
      %v1248 = vld [vmem:[%s1247] sm:$0xff]
      %s1249 = smul.u32 %s1012, 2
      %s1250 = smul.addr %s1249, 8
      %s1251 = scalar_lea.vmem [#allocation17], %s1250
      %1252 = vst [vmem:[%s1251] sm:$0xff] %v1248
      %1253 = vst [vmem:[%s1251 + $0x8] sm:$0xff] %v1245
    $region89: #{tpu_custom_call.1} parent=1 // loop_footer
      %s1010 = sadd.s32 1, %s1006
    $region90: #{tpu_custom_call.1} parent=1 // loop_footer_branch
      %1005 = sbr.rel target = $region86
    $region91: #{tpu_custom_call.1} parent=1 // loop_exit
      _
    %v1254 = vld [vmem:[#allocation14] sm:$0xff]
    %v1255 = vld [vmem:[#allocation14 + $0x8] sm:$0xff]
    %v1256 = vld [vmem:[#allocation14 + $0x10] sm:$0xff]
    %v1257 = vld [vmem:[#allocation14 + $0x18] sm:$0xff]
    %v1258 = vld [vmem:[#allocation14 + $0x20] sm:$0xff]
    %v1259 = vld [vmem:[#allocation14 + $0x28] sm:$0xff]
    %v1260 = vld [vmem:[#allocation14 + $0x30] sm:$0xff]
    %v1261 = vld [vmem:[#allocation14 + $0x38] sm:$0xff]
    %v1262 = vld [vmem:[#allocation14 + $0x40] sm:$0xff]
    %v1263 = vld [vmem:[#allocation14 + $0x48] sm:$0xff]
    %v1264 = vld [vmem:[#allocation14 + $0x50] sm:$0xff]
    %v1265 = vld [vmem:[#allocation14 + $0x58] sm:$0xff]
    %v1266 = vld [vmem:[#allocation14 + $0x60] sm:$0xff]
    %v1267 = vld [vmem:[#allocation14 + $0x68] sm:$0xff]
    %v1268 = vld [vmem:[#allocation14 + $0x70] sm:$0xff]
    %v1269 = vld [vmem:[#allocation14 + $0x78] sm:$0xff]
    %v1270 = vld [vmem:[#allocation16] sm:$0xff]
    %v1271 = vld [vmem:[#allocation16 + $0x8] sm:$0xff]
    %v1272 = vld [vmem:[#allocation16 + $0x10] sm:$0xff]
    %v1273 = vld [vmem:[#allocation16 + $0x18] sm:$0xff]
    %v1274 = vld [vmem:[#allocation16 + $0x20] sm:$0xff]
    %v1275 = vld [vmem:[#allocation16 + $0x28] sm:$0xff]
    %v1276 = vld [vmem:[#allocation16 + $0x30] sm:$0xff]
    %v1277 = vld [vmem:[#allocation16 + $0x38] sm:$0xff]
    %v1278 = vld [vmem:[#allocation16 + $0x40] sm:$0xff]
    %v1279 = vld [vmem:[#allocation16 + $0x48] sm:$0xff]
    %v1280 = vld [vmem:[#allocation16 + $0x50] sm:$0xff]
    %v1281 = vld [vmem:[#allocation16 + $0x58] sm:$0xff]
    %v1282 = vld [vmem:[#allocation16 + $0x60] sm:$0xff]
    %v1283 = vld [vmem:[#allocation16 + $0x68] sm:$0xff]
    %v1284 = vld [vmem:[#allocation16 + $0x70] sm:$0xff]
    %v1285 = vld [vmem:[#allocation16 + $0x78] sm:$0xff]
    %1286 = vmatprep.subr.mxu0 0.0
    %1287 = vmatpush1.msra.mxu0 %v1285
    %1288 = vmatprep.subr.mxu0 0.0
    %1289 = vmatpush1.msra.mxu0 %v1284
    %1290 = vmatprep.subr.mxu0 0.0
    %1291 = vmatpush1.msra.mxu0 %v1283
    %1292 = vmatprep.subr.mxu0 0.0
    %1293 = vmatpush1.msra.mxu0 %v1282
    %1294 = vmatprep.subr.mxu0 0.0
    %1295 = vmatpush1.msra.mxu0 %v1281
    %1296 = vmatprep.subr.mxu0 0.0
    %1297 = vmatpush1.msra.mxu0 %v1280
    %1298 = vmatprep.subr.mxu0 0.0
    %1299 = vmatpush1.msra.mxu0 %v1279
    %1300 = vmatprep.subr.mxu0 0.0
    %1301 = vmatpush1.msra.mxu0 %v1278
    %1302 = vmatprep.subr.mxu0 0.0
    %1303 = vmatpush1.msra.mxu0 %v1277
    %1304 = vmatprep.subr.mxu0 0.0
    %1305 = vmatpush1.msra.mxu0 %v1276
    %1306 = vmatprep.subr.mxu0 0.0
    %1307 = vmatpush1.msra.mxu0 %v1275
    %1308 = vmatprep.subr.mxu0 0.0
    %1309 = vmatpush1.msra.mxu0 %v1274
    %1310 = vmatprep.subr.mxu0 0.0
    %1311 = vmatpush1.msra.mxu0 %v1273
    %1312 = vmatprep.subr.mxu0 0.0
    %1313 = vmatpush1.msra.mxu0 %v1272
    %1314 = vmatprep.subr.mxu0 0.0
    %1315 = vmatpush1.msra.mxu0 %v1271
    %1316 = vmatprep.subr.mxu0 0.0
    %1317 = vmatpush1.msra.mxu0 %v1270
    %1318 = vmatprep.subr.mxu0 0.0
    %1319 = vmatpush2.msra.mxu0 0.0
    %1320 = vmatprep.subr.mxu0 0.0
    %1321 = vmatpush2.msra.mxu0 0.0
    %1322 = vmatprep.subr.mxu0 0.0
    %1323 = vmatpush2.msra.mxu0 0.0
    %1324 = vmatprep.subr.mxu0 0.0
    %1325 = vmatpush2.msra.mxu0 0.0
    %1326 = vmatprep.subr.mxu0 0.0
    %1327 = vmatpush2.msra.mxu0 0.0
    %1328 = vmatprep.subr.mxu0 0.0
    %1329 = vmatpush2.msra.mxu0 0.0
    %1330 = vmatprep.subr.mxu0 0.0
    %1331 = vmatpush2.msra.mxu0 0.0
    %1332 = vmatprep.subr.mxu0 0.0
    %1333 = vmatpush2.msra.mxu0 0.0
    %1334 = vmatprep.subr.mxu0 0.0
    %1335 = vmatpush2.msra.mxu0 0.0
    %1336 = vmatprep.subr.mxu0 0.0
    %1337 = vmatpush2.msra.mxu0 0.0
    %1338 = vmatprep.subr.mxu0 0.0
    %1339 = vmatpush2.msra.mxu0 0.0
    %1340 = vmatprep.subr.mxu0 0.0
    %1341 = vmatpush2.msra.mxu0 0.0
    %1342 = vmatprep.subr.mxu0 0.0
    %1343 = vmatpush2.msra.mxu0 0.0
    %1344 = vmatprep.subr.mxu0 0.0
    %1345 = vmatpush2.msra.mxu0 0.0
    %1346 = vmatprep.subr.mxu0 0.0
    %1347 = vmatpush2.msra.mxu0 0.0
    %1348 = vmatprep.subr.mxu0 0.0
    %1349 = vmatpush2.msra.mxu0 0.0
    %1350 = vmatprep.mubr.f32.mxu0 0.0
    %1351 = vmatmul.mubr.f32.gmra.mxu0 %v1011
    %v1352 = vpop.f32.mrf.mxu0
    %v1353 = vadd.f32 0.0, %v1352
    %v1354 = vpop.f32.mrf.mxu0
    %1355 = vdwg.mxu0
    %1356 = vmatprep.subr.mxu0 0.0
    %1357 = vmatpush1.msra.mxu0 %v1269
    %1358 = vmatprep.subr.mxu0 0.0
    %1359 = vmatpush1.msra.mxu0 %v1268
    %1360 = vmatprep.subr.mxu0 0.0
    %1361 = vmatpush1.msra.mxu0 %v1267
    %1362 = vmatprep.subr.mxu0 0.0
    %1363 = vmatpush1.msra.mxu0 %v1266
    %1364 = vmatprep.subr.mxu0 0.0
    %1365 = vmatpush1.msra.mxu0 %v1265
    %1366 = vmatprep.subr.mxu0 0.0
    %1367 = vmatpush1.msra.mxu0 %v1264
    %1368 = vmatprep.subr.mxu0 0.0
    %1369 = vmatpush1.msra.mxu0 %v1263
    %1370 = vmatprep.subr.mxu0 0.0
    %1371 = vmatpush1.msra.mxu0 %v1262
    %1372 = vmatprep.subr.mxu0 0.0
    %1373 = vmatpush1.msra.mxu0 %v1261
    %1374 = vmatprep.subr.mxu0 0.0
    %1375 = vmatpush1.msra.mxu0 %v1260
    %1376 = vmatprep.subr.mxu0 0.0
    %1377 = vmatpush1.msra.mxu0 %v1259
    %1378 = vmatprep.subr.mxu0 0.0
    %1379 = vmatpush1.msra.mxu0 %v1258
    %1380 = vmatprep.subr.mxu0 0.0
    %1381 = vmatpush1.msra.mxu0 %v1257
    %1382 = vmatprep.subr.mxu0 0.0
    %1383 = vmatpush1.msra.mxu0 %v1256
    %1384 = vmatprep.subr.mxu0 0.0
    %1385 = vmatpush1.msra.mxu0 %v1255
    %1386 = vmatprep.subr.mxu0 0.0
    %1387 = vmatpush1.msra.mxu0 %v1254
    %1388 = vmatprep.subr.mxu0 0.0
    %1389 = vmatpush2.msra.mxu0 0.0
    %1390 = vmatprep.subr.mxu0 0.0
    %1391 = vmatpush2.msra.mxu0 0.0
    %1392 = vmatprep.subr.mxu0 0.0
    %1393 = vmatpush2.msra.mxu0 0.0
    %1394 = vmatprep.subr.mxu0 0.0
    %1395 = vmatpush2.msra.mxu0 0.0
    %1396 = vmatprep.subr.mxu0 0.0
    %1397 = vmatpush2.msra.mxu0 0.0
    %1398 = vmatprep.subr.mxu0 0.0
    %1399 = vmatpush2.msra.mxu0 0.0
    %1400 = vmatprep.subr.mxu0 0.0
    %1401 = vmatpush2.msra.mxu0 0.0
    %1402 = vmatprep.subr.mxu0 0.0
    %1403 = vmatpush2.msra.mxu0 0.0
    %1404 = vmatprep.subr.mxu0 0.0
    %1405 = vmatpush2.msra.mxu0 0.0
    %1406 = vmatprep.subr.mxu0 0.0
    %1407 = vmatpush2.msra.mxu0 0.0
    %1408 = vmatprep.subr.mxu0 0.0
    %1409 = vmatpush2.msra.mxu0 0.0
    %1410 = vmatprep.subr.mxu0 0.0
    %1411 = vmatpush2.msra.mxu0 0.0
    %1412 = vmatprep.subr.mxu0 0.0
    %1413 = vmatpush2.msra.mxu0 0.0
    %1414 = vmatprep.subr.mxu0 0.0
    %1415 = vmatpush2.msra.mxu0 0.0
    %1416 = vmatprep.subr.mxu0 0.0
    %1417 = vmatpush2.msra.mxu0 0.0
    %1418 = vmatprep.subr.mxu0 0.0
    %1419 = vmatpush2.msra.mxu0 0.0
    %1420 = vmatprep.mubr.f32.mxu0 0.0
    %1421 = vmatmul.mubr.f32.gmra.mxu0 %v768
    %v1422 = vpop.f32.mrf.mxu0
    %v1423 = vadd.f32 %v1353, %v1422
    %v1424 = vpop.f32.mrf.mxu0
    %1425 = vdwg.mxu0
    %v1426 = vld [vmem:[%s11] sm:$0x1]
    %v1428 = vlaneseq
    %v1429 = vshrl.u32 %v1428, 7
    %v1430 = vsub.s32 0, %v1429
    %v1431 = vrot.slane %v1426, %v1430
    %v1433 = vadd.f32 %v1423, %v1431
    %v1434 = vtanh.pop %v1433
    %1435 = vst [vmem:[#allocation18] sm:$0xff] %v1434
    // Predicated region
    $region92: #{tpu_custom_call.1} parent=1 // pred_check
      _
    $region93: #{tpu_custom_call.1} parent=1 // pred_check_branch
      %1437 = sbr.rel (0) target = $region95
    $region94: #{tpu_custom_call.1} parent=1 // pred_region
      %s1439 = ssub.s32 2048, 2048
      %1440 = vsyncadd [#allocation7], %s1439
      %s1441 = sshll.u32 [#allocation17], 4
      %s1442 = int_to_ptr.vmem [resolvable:$true] %s1441
      %1447 = dma.vmem_to_hbm [thread:$0]  %s1442, 2048, %s12, [#allocation7], 256, 256, 16
    $region95: #{tpu_custom_call.1} parent=1 // pred_fallthru
      _
    // Predicated region
    $region96: #{tpu_custom_call.1} parent=1 // pred_check
      _
    $region97: #{tpu_custom_call.1} parent=1 // pred_check_branch
      %1449 = sbr.rel (0) target = $region99
    $region98: #{tpu_custom_call.1} parent=1 // pred_region
      %s1451 = ssub.s32 128, 128
      %1452 = vsyncadd [#allocation19], %s1451
      %s1454 = sshll.u32 [#allocation18], 4
      %s1455 = int_to_ptr.vmem [resolvable:$true] %s1454
      %1457 = dma.vmem_to_hbm [thread:$0]  %s1455, 128, %s13, [#allocation19]
    $region99: #{tpu_custom_call.1} parent=1 // pred_fallthru
      _
    // Predicated region
    $region100: #{tpu_custom_call.1} parent=1 // pred_check
      _
    $region101: #{tpu_custom_call.1} parent=1 // pred_check_branch
      %1459 = sbr.rel (0) target = $region103
    $region102: #{tpu_custom_call.1} parent=1 // pred_region
      %1460 = dma.done [#allocation7], 2048
    $region103: #{tpu_custom_call.1} parent=1 // pred_fallthru
      _
    // Predicated region
    $region104: #{tpu_custom_call.1} parent=1 // pred_check
      _
    $region105: #{tpu_custom_call.1} parent=1 // pred_check_branch
      %1462 = sbr.rel (0) target = $region107
    $region106: #{tpu_custom_call.1} parent=1 // pred_region
      %1463 = dma.done [#allocation19], 128
    $region107: #{tpu_custom_call.1} parent=1 // pred_fallthru
      _
    %1464 = vsyncpa [#allocation6], 1
    %1465 = vsyncpa [#allocation9], 1
    %1466 = vsyncpa [#allocation12], 1
    %1467 = vsyncpa [#allocation15], 1
    %1468 = vsyncpa [#allocation7], 1
    %1469 = vsyncpa [#allocation19], 1

</llo_original>
